<compile_context>
chip_gen: v5e
topology: v5e:2x2
jax: 0.10.0
libtpu: 0.0.40
codegen_flags: <defaults>
</compile_context>

<pallas_src>
import functools

import jax
import jax.numpy as jnp
import numpy as np
from jax.experimental import pallas as pl
from jax.experimental.pallas import tpu as pltpu


# ------------------------------ Fused kernel ---------------------------------

def _make_lstm_model_kernel(T, B, H, L):
    """Builds the fused LSTM(+FC) kernel for static T, padded batch B, H, L.

    Kernel ref order (flat):
      x,  [w_ih_l, w_hh_l, b_l] * L,  w_fc, b_fc,   out,   gx_sc, hseq_sc
    where
      x     : (T, B, input_size)  time-major, batch padded to a multiple of 8
      w_ih_l: (F_in_l, 4H)        PyTorch weight transposed, i/f/o rows *0.5
      w_hh_l: (H, 4H)             (same 0.5 pre-scale on i/f/o columns)
      b_l   : (1, 4H)             (= (b_ih + b_hh), i/f/o entries *0.5)
      w_fc  : (H, O), b_fc: (1, O)
      out   : (B, O)
      gx_sc  : VMEM (T, B, 4H)    hoisted input-projection gates
      hseq_sc: VMEM (T, B, H)     hidden sequence of the previous layer
    """

    def kernel(*refs):
        x_ref = refs[0]
        layer_refs = refs[1:1 + 3 * L]
        wfc_ref = refs[1 + 3 * L]
        bfc_ref = refs[2 + 3 * L]
        out_ref = refs[3 + 3 * L]
        gx_sc = refs[4 + 3 * L]
        hseq_sc = refs[5 + 3 * L]

        unroll = True if T <= 16 else 8
        h_last = None

        for layer in range(L):
            wih_ref = layer_refs[3 * layer]      # (F_in, 4H)
            whh_ref = layer_refs[3 * layer + 1]  # (H, 4H)
            b_ref = layer_refs[3 * layer + 2]    # (1, 4H)

            # Hoisted input projection + bias for ALL timesteps at once:
            # one batched MXU matmul instead of T tiny per-step matmuls.
            if layer == 0:
                f_in = x_ref.shape[-1]
                x2d = x_ref[...].reshape(T * B, f_in)          # (T*B, F)
            else:
                x2d = hseq_sc[...].reshape(T * B, H)           # (T*B, H)
            gx2d = (jnp.dot(x2d, wih_ref[...],
                            preferred_element_type=jnp.float32)
                    + b_ref[...])                              # (T*B, 4H)
            gx_sc[...] = gx2d.reshape(T, B, 4 * H)

            whh = whh_ref[...]                   # hoisted out of the time loop
            write_seq = layer < L - 1            # last layer: only final h used

            def step(t, carry, whh=whh, write_seq=write_seq):
                h_prev, c_prev = carry
                # Only the serial part stays inside the recurrence; gx_sc[t]
                # is a clean leading-axis load of one (B, 4H) tile.
                gates = gx_sc[t] + jnp.dot(
                    h_prev, whh, preferred_element_type=jnp.float32)  # (B, 4H)
                # One full-vreg tanh for all four gates.  i/f/o pre-activations
                # were pre-scaled by 0.5 in the wrapper, so
                #   sigmoid(z) == 0.5 * tanh(z/2) + 0.5 == 0.5 * t_all + 0.5.
                t_all = jnp.tanh(gates)
                sig = t_all * 0.5 + 0.5
                i_g = sig[:, 0 * H:1 * H]
                f_g = sig[:, 1 * H:2 * H]
                g_g = t_all[:, 2 * H:3 * H]      # g gate left unscaled -> tanh
                o_g = sig[:, 3 * H:4 * H]
                c_new = f_g * c_prev + i_g * g_g
                h_new = o_g * jnp.tanh(c_new)    # 2nd (and last) EUP op
                if write_seq:
                    hseq_sc[t] = h_new           # leading-axis store, unmasked
                return (h_new, c_new)

            h0 = jnp.zeros((B, H), jnp.float32)
            c0 = jnp.zeros((B, H), jnp.float32)
            h_last, _ = jax.lax.fori_loop(0, T, step, (h0, c0), unroll=unroll)

        # Final Linear on the last timestep's hidden state, fused in-kernel.
        out_ref[...] = (jnp.dot(h_last, wfc_ref[...],
                                preferred_element_type=jnp.float32)
                        + bfc_ref[...]).astype(out_ref.dtype)

    return kernel


# ------------------------------ Model forward ---------------------------------

def _padded_f32_bytes(shape):
    """Bytes of an f32 array after (8,128) tile padding of the last two dims."""
    s = list(shape)
    if len(s) >= 1:
        s[-1] = -(-s[-1] // 128) * 128
    if len(s) >= 2:
        s[-2] = -(-s[-2] // 8) * 8
    return int(np.prod(s)) * 4


def lstm_model_forward(params, x_bti):
    """Equivalent of LSTMModel.forward for batch_first input x (B, T, input)."""
    B, T, F = x_bti.shape
    L = len(params["lstm"])
    H = params["lstm"][0]["w_hh"].shape[1]
    O = params["fc_w"].shape[0]

    # Pad batch to a full sublane group (multiple of 8).  Padded rows see zero
    # inputs and zero initial state; the LSTM never mixes batch rows, so we
    # simply slice the real rows from the output.
    B_pad = max(8, ((B + 7) // 8) * 8)

    x_tbf = jnp.transpose(x_bti.astype(jnp.float32), (1, 0, 2))   # (T, B, F)
    if B_pad != B:
        x_tbf = jnp.pad(x_tbf, ((0, 0), (0, B_pad - B), (0, 0)))

    # sigmoid(z) = 0.5 * tanh(0.5 z) + 0.5: fold the 0.5 into the i/f/o gate
    # rows of W_ih, W_hh and the bias (gate order i, f, g, o).
    scale = jnp.concatenate([
        jnp.full((H,), 0.5, jnp.float32),   # i
        jnp.full((H,), 0.5, jnp.float32),   # f
        jnp.ones((H,), jnp.float32),        # g (stays tanh)
        jnp.full((H,), 0.5, jnp.float32),   # o
    ])

    inputs = [x_tbf]
    for p in params["lstm"]:
        w_ih = (p["w_ih"].astype(jnp.float32) * scale[:, None]).T      # (F_in, 4H)
        w_hh = (p["w_hh"].astype(jnp.float32) * scale[:, None]).T      # (H, 4H)
        b = ((p["b_ih"] + p["b_hh"]).astype(jnp.float32) * scale
             ).reshape(1, 4 * H)                                       # (1, 4H)
        inputs += [w_ih, w_hh, b]
    inputs.append(jnp.transpose(params["fc_w"]).astype(jnp.float32))   # (H, O)
    inputs.append(params["fc_b"].reshape(1, O).astype(jnp.float32))    # (1, O)

    # Explicit VMEM budget: all inputs are VMEM-resident (double-buffered by
    # the pipeline even without a grid) + the two scratch slabs + the output.
    vmem = 2 * sum(_padded_f32_bytes(a.shape) for a in inputs)
    vmem += _padded_f32_bytes((T, B_pad, 4 * H))
    vmem += _padded_f32_bytes((T, B_pad, H))
    vmem += 2 * _padded_f32_bytes((B_pad, O))
    vmem_limit = int(min(max(2 * vmem + (4 << 20), 16 << 20), 100 << 20))

    # TODO(synk): nn.LSTM inter-layer dropout(p=0.2) applies only in train mode;
    # eval-mode semantics implemented here (no dropout).
    kernel = _make_lstm_model_kernel(T=T, B=B_pad, H=H, L=L)
    out = pl.pallas_call(
        kernel,
        out_shape=jax.ShapeDtypeStruct((B_pad, O), jnp.float32),
        scratch_shapes=[
            pltpu.VMEM((T, B_pad, 4 * H), jnp.float32),   # hoisted gates
            pltpu.VMEM((T, B_pad, H), jnp.float32),       # prev-layer h sequence
        ],
        compiler_params=pltpu.CompilerParams(vmem_limit_bytes=vmem_limit),
    )(*inputs)
    return out[:B]


# ------------------------------ Param construction -----------------------------

def init_params(key, input_size, hidden_size, num_layers, output_size):
    """Deterministic init matching PyTorch parameter shapes (U[-1/sqrt(H), 1/sqrt(H)])."""
    bound = 1.0 / np.sqrt(hidden_size)
    params = {"lstm": []}
    for l in range(num_layers):
        in_f = input_size if l == 0 else hidden_size
        key, k1, k2, k3, k4 = jax.random.split(key, 5)
        params["lstm"].append({
            "w_ih": jax.random.uniform(k1, (4 * hidden_size, in_f),
                                       jnp.float32, -bound, bound),
            "w_hh": jax.random.uniform(k2, (4 * hidden_size, hidden_size),
                                       jnp.float32, -bound, bound),
            "b_ih": jax.random.uniform(k3, (4 * hidden_size,),
                                       jnp.float32, -bound, bound),
            "b_hh": jax.random.uniform(k4, (4 * hidden_size,),
                                       jnp.float32, -bound, bound),
        })
    key, k1, k2 = jax.random.split(key, 3)
    params["fc_w"] = jax.random.uniform(k1, (output_size, hidden_size),
                                        jnp.float32, -bound, bound)
    params["fc_b"] = jax.random.uniform(k2, (output_size,),
                                        jnp.float32, -bound, bound)
    return params


# ---------------------------- Pure-JAX reference check -------------------------

def _ref_layer(x_tbf, p):
    H = p["w_hh"].shape[1]
    B = x_tbf.shape[1]

    def step(carry, x_t):
        h_prev, c_prev = carry
        gates = (x_t @ p["w_ih"].T + h_prev @ p["w_hh"].T
                 + p["b_ih"] + p["b_hh"])
        i, f, g, o = jnp.split(gates, 4, axis=-1)
        i, f, o = jax.nn.sigmoid(i), jax.nn.sigmoid(f), jax.nn.sigmoid(o)
        g = jnp.tanh(g)
        c = f * c_prev + i * g
        h = o * jnp.tanh(c)
        return (h, c), h

    init = (jnp.zeros((B, H), jnp.float32), jnp.zeros((B, H), jnp.float32))
    _, hs = jax.lax.scan(step, init, x_tbf)
    return hs


def lstm_model_ref(params, x_bti):
    h = jnp.transpose(x_bti, (1, 0, 2)).astype(jnp.float32)
    for p in params["lstm"]:
        h = _ref_layer(h, p)
    return h[-1] @ params["fc_w"].T + params["fc_b"]


# ------------------------------------- main -------------------------------------

if __name__ == "__main__":
    INPUT_SIZE, HIDDEN_SIZE, NUM_LAYERS, OUTPUT_SIZE = 16, 32, 2, 4
    BATCH, SEQ = 2, 8

    key = jax.random.PRNGKey(0)
    key, pkey, xkey = jax.random.split(key, 3)
    params = init_params(pkey, INPUT_SIZE, HIDDEN_SIZE, NUM_LAYERS, OUTPUT_SIZE)
    x = jax.random.normal(xkey, (BATCH, SEQ, INPUT_SIZE), jnp.float32)

    fwd = jax.jit(functools.partial(lstm_model_forward, params))
    out = fwd(x)
    jax.block_until_ready(out)

    ref = lstm_model_ref(params, x)
    # tanh-based sigmoid + pre-scaled weights are mathematically identical to
    # the reference; only f32 rounding differs, so keep a tight tolerance.
    np.testing.assert_allclose(np.asarray(out), np.asarray(ref),
                               rtol=1e-4, atol=1e-5)
    assert out.shape == (BATCH, OUTPUT_SIZE)
    print("KERNEL_OK")
</pallas_src>

<mosaic_0001>
module attributes {stable_mosaic.version = 11 : i64} {
  func.func @kernel(%arg0: memref<8x8x16xf32, #tpu.memory_space<vmem>>, %arg1: memref<16x128xf32, #tpu.memory_space<vmem>>, %arg2: memref<32x128xf32, #tpu.memory_space<vmem>>, %arg3: memref<1x128xf32, #tpu.memory_space<vmem>>, %arg4: memref<32x128xf32, #tpu.memory_space<vmem>>, %arg5: memref<32x128xf32, #tpu.memory_space<vmem>>, %arg6: memref<1x128xf32, #tpu.memory_space<vmem>>, %arg7: memref<32x4xf32, #tpu.memory_space<vmem>>, %arg8: memref<1x4xf32, #tpu.memory_space<vmem>>, %arg9: memref<8x4xf32, #tpu.memory_space<vmem>>, %arg10: memref<8x8x128xf32, #tpu.memory_space<vmem>>, %arg11: memref<8x8x32xf32, #tpu.memory_space<vmem>>) attributes {dimension_semantics = [], scalar_prefetch = 0 : i64, scratch_operands = 2 : i64, tpu.core_type = #tpu.core_type<tc>} {
    %c0 = arith.constant 0 : index
    %c0_0 = arith.constant 0 : index
    %c0_1 = arith.constant 0 : index
    %0 = vector.load %arg0[%c0, %c0_0, %c0_1] : memref<8x8x16xf32, #tpu.memory_space<vmem>>, vector<8x8x16xf32>
    %1 = vector.shape_cast %0 : vector<8x8x16xf32> to vector<64x16xf32>
    %c0_2 = arith.constant 0 : index
    %c0_3 = arith.constant 0 : index
    %2 = vector.load %arg1[%c0_2, %c0_3] : memref<16x128xf32, #tpu.memory_space<vmem>>, vector<16x128xf32>
    %cst = arith.constant dense<0.000000e+00> : vector<64x128xf32>
    %3 = tpu.matmul %1, %2, %cst {dimension_numbers = #tpu.dot_dimension_numbers<[1], [0], [0], [1], [0, 0, 1, 1], [], []>} : vector<64x16xf32>, vector<16x128xf32>, vector<64x128xf32> -> vector<64x128xf32>
    %c0_4 = arith.constant 0 : index
    %c0_5 = arith.constant 0 : index
    %4 = vector.load %arg3[%c0_4, %c0_5] : memref<1x128xf32, #tpu.memory_space<vmem>>, vector<1x128xf32>
    %5 = vector.broadcast %4 : vector<1x128xf32> to vector<64x128xf32>
    %6 = arith.addf %3, %5 : vector<64x128xf32>
    %7 = vector.shape_cast %6 : vector<64x128xf32> to vector<8x8x128xf32>
    %c0_6 = arith.constant 0 : index
    %c0_7 = arith.constant 0 : index
    %c0_8 = arith.constant 0 : index
    %8 = vector.load %arg10[%c0_6, %c0_7, %c0_8] : memref<8x8x128xf32, #tpu.memory_space<vmem>>, vector<8x8x128xf32>
    tpu.vector_store %arg10[%c0_6, %c0_7, %c0_8], %7 {strides = array<i32>} : memref<8x8x128xf32, #tpu.memory_space<vmem>>, vector<8x8x128xf32>,
    %c0_9 = arith.constant 0 : index
    %c0_10 = arith.constant 0 : index
    %9 = vector.load %arg2[%c0_9, %c0_10] : memref<32x128xf32, #tpu.memory_space<vmem>>, vector<32x128xf32>
    %cst_11 = arith.constant 0.000000e+00 : f32
    %10 = vector.broadcast %cst_11 : f32 to vector<8x32xf32>
    %cst_12 = arith.constant 0.000000e+00 : f32
    %11 = vector.broadcast %cst_12 : f32 to vector<8x32xf32>
    %c0_i32 = arith.constant 0 : i32
    %12 = arith.index_cast %c0_i32 : i32 to index
    %c0_13 = arith.constant 0 : index
    %c0_14 = arith.constant 0 : index
    %13 = vector.load %arg10[%12, %c0_13, %c0_14] : memref<8x8x128xf32, #tpu.memory_space<vmem>>, vector<1x8x128xf32>
    %14 = vector.shape_cast %13 : vector<1x8x128xf32> to vector<8x128xf32>
    %cst_15 = arith.constant dense<0.000000e+00> : vector<8x128xf32>
    %15 = tpu.matmul %10, %9, %cst_15 {dimension_numbers = #tpu.dot_dimension_numbers<[1], [0], [0], [1], [0, 0, 1, 1], [], []>} : vector<8x32xf32>, vector<32x128xf32>, vector<8x128xf32> -> vector<8x128xf32>
    %16 = arith.addf %14, %15 : vector<8x128xf32>
    %17 = math.tanh %16 : vector<8x128xf32>
    %cst_16 = arith.constant 5.000000e-01 : f32
    %18 = vector.broadcast %cst_16 : f32 to vector<8x128xf32>
    %19 = arith.mulf %17, %18 : vector<8x128xf32>
    %cst_17 = arith.constant 5.000000e-01 : f32
    %20 = vector.broadcast %cst_17 : f32 to vector<8x128xf32>
    %21 = arith.addf %19, %20 : vector<8x128xf32>
    %22 = vector.extract_strided_slice %21 {offsets = [0, 0], sizes = [8, 32], strides = [1, 1]} : vector<8x128xf32> to vector<8x32xf32>
    %23 = vector.extract_strided_slice %21 {offsets = [0, 32], sizes = [8, 32], strides = [1, 1]} : vector<8x128xf32> to vector<8x32xf32>
    %24 = vector.extract_strided_slice %17 {offsets = [0, 64], sizes = [8, 32], strides = [1, 1]} : vector<8x128xf32> to vector<8x32xf32>
    %25 = vector.extract_strided_slice %21 {offsets = [0, 96], sizes = [8, 32], strides = [1, 1]} : vector<8x128xf32> to vector<8x32xf32>
    %26 = arith.mulf %23, %11 : vector<8x32xf32>
    %27 = arith.mulf %22, %24 : vector<8x32xf32>
    %28 = arith.addf %26, %27 : vector<8x32xf32>
    %29 = math.tanh %28 : vector<8x32xf32>
    %30 = arith.mulf %25, %29 : vector<8x32xf32>
    %31 = arith.index_cast %c0_i32 : i32 to index
    %c0_18 = arith.constant 0 : index
    %c0_19 = arith.constant 0 : index
    %32 = vector.load %arg11[%31, %c0_18, %c0_19] : memref<8x8x32xf32, #tpu.memory_space<vmem>>, vector<1x8x32xf32>
    %33 = vector.shape_cast %32 : vector<1x8x32xf32> to vector<8x32xf32>
    %34 = vector.shape_cast %30 : vector<8x32xf32> to vector<1x8x32xf32>
    tpu.vector_store %arg11[%31, %c0_18, %c0_19], %34 {strides = array<i32>} : memref<8x8x32xf32, #tpu.memory_space<vmem>>, vector<1x8x32xf32>,
    %c1_i32 = arith.constant 1 : i32
    %35 = arith.index_cast %c1_i32 : i32 to index
    %c0_20 = arith.constant 0 : index
    %c0_21 = arith.constant 0 : index
    %36 = vector.load %arg10[%35, %c0_20, %c0_21] : memref<8x8x128xf32, #tpu.memory_space<vmem>>, vector<1x8x128xf32>
    %37 = vector.shape_cast %36 : vector<1x8x128xf32> to vector<8x128xf32>
    %cst_22 = arith.constant dense<0.000000e+00> : vector<8x128xf32>
    %38 = tpu.matmul %30, %9, %cst_22 {dimension_numbers = #tpu.dot_dimension_numbers<[1], [0], [0], [1], [0, 0, 1, 1], [], []>} : vector<8x32xf32>, vector<32x128xf32>, vector<8x128xf32> -> vector<8x128xf32>
    %39 = arith.addf %37, %38 : vector<8x128xf32>
    %40 = math.tanh %39 : vector<8x128xf32>
    %cst_23 = arith.constant 5.000000e-01 : f32
    %41 = vector.broadcast %cst_23 : f32 to vector<8x128xf32>
    %42 = arith.mulf %40, %41 : vector<8x128xf32>
    %cst_24 = arith.constant 5.000000e-01 : f32
    %43 = vector.broadcast %cst_24 : f32 to vector<8x128xf32>
    %44 = arith.addf %42, %43 : vector<8x128xf32>
    %45 = vector.extract_strided_slice %44 {offsets = [0, 0], sizes = [8, 32], strides = [1, 1]} : vector<8x128xf32> to vector<8x32xf32>
    %46 = vector.extract_strided_slice %44 {offsets = [0, 32], sizes = [8, 32], strides = [1, 1]} : vector<8x128xf32> to vector<8x32xf32>
    %47 = vector.extract_strided_slice %40 {offsets = [0, 64], sizes = [8, 32], strides = [1, 1]} : vector<8x128xf32> to vector<8x32xf32>
    %48 = vector.extract_strided_slice %44 {offsets = [0, 96], sizes = [8, 32], strides = [1, 1]} : vector<8x128xf32> to vector<8x32xf32>
    %49 = arith.mulf %46, %28 : vector<8x32xf32>
    %50 = arith.mulf %45, %47 : vector<8x32xf32>
    %51 = arith.addf %49, %50 : vector<8x32xf32>
    %52 = math.tanh %51 : vector<8x32xf32>
    %53 = arith.mulf %48, %52 : vector<8x32xf32>
    %54 = arith.index_cast %c1_i32 : i32 to index
    %c0_25 = arith.constant 0 : index
    %c0_26 = arith.constant 0 : index
    %55 = vector.load %arg11[%54, %c0_25, %c0_26] : memref<8x8x32xf32, #tpu.memory_space<vmem>>, vector<1x8x32xf32>
    %56 = vector.shape_cast %55 : vector<1x8x32xf32> to vector<8x32xf32>
    %57 = vector.shape_cast %53 : vector<8x32xf32> to vector<1x8x32xf32>
    tpu.vector_store %arg11[%54, %c0_25, %c0_26], %57 {strides = array<i32>} : memref<8x8x32xf32, #tpu.memory_space<vmem>>, vector<1x8x32xf32>,
    %c2_i32 = arith.constant 2 : i32
    %58 = arith.index_cast %c2_i32 : i32 to index
    %c0_27 = arith.constant 0 : index
    %c0_28 = arith.constant 0 : index
    %59 = vector.load %arg10[%58, %c0_27, %c0_28] : memref<8x8x128xf32, #tpu.memory_space<vmem>>, vector<1x8x128xf32>
    %60 = vector.shape_cast %59 : vector<1x8x128xf32> to vector<8x128xf32>
    %cst_29 = arith.constant dense<0.000000e+00> : vector<8x128xf32>
    %61 = tpu.matmul %53, %9, %cst_29 {dimension_numbers = #tpu.dot_dimension_numbers<[1], [0], [0], [1], [0, 0, 1, 1], [], []>} : vector<8x32xf32>, vector<32x128xf32>, vector<8x128xf32> -> vector<8x128xf32>
    %62 = arith.addf %60, %61 : vector<8x128xf32>
    %63 = math.tanh %62 : vector<8x128xf32>
    %cst_30 = arith.constant 5.000000e-01 : f32
    %64 = vector.broadcast %cst_30 : f32 to vector<8x128xf32>
    %65 = arith.mulf %63, %64 : vector<8x128xf32>
    %cst_31 = arith.constant 5.000000e-01 : f32
    %66 = vector.broadcast %cst_31 : f32 to vector<8x128xf32>
    %67 = arith.addf %65, %66 : vector<8x128xf32>
    %68 = vector.extract_strided_slice %67 {offsets = [0, 0], sizes = [8, 32], strides = [1, 1]} : vector<8x128xf32> to vector<8x32xf32>
    %69 = vector.extract_strided_slice %67 {offsets = [0, 32], sizes = [8, 32], strides = [1, 1]} : vector<8x128xf32> to vector<8x32xf32>
    %70 = vector.extract_strided_slice %63 {offsets = [0, 64], sizes = [8, 32], strides = [1, 1]} : vector<8x128xf32> to vector<8x32xf32>
    %71 = vector.extract_strided_slice %67 {offsets = [0, 96], sizes = [8, 32], strides = [1, 1]} : vector<8x128xf32> to vector<8x32xf32>
    %72 = arith.mulf %69, %51 : vector<8x32xf32>
    %73 = arith.mulf %68, %70 : vector<8x32xf32>
    %74 = arith.addf %72, %73 : vector<8x32xf32>
    %75 = math.tanh %74 : vector<8x32xf32>
    %76 = arith.mulf %71, %75 : vector<8x32xf32>
    %77 = arith.index_cast %c2_i32 : i32 to index
    %c0_32 = arith.constant 0 : index
    %c0_33 = arith.constant 0 : index
    %78 = vector.load %arg11[%77, %c0_32, %c0_33] : memref<8x8x32xf32, #tpu.memory_space<vmem>>, vector<1x8x32xf32>
    %79 = vector.shape_cast %78 : vector<1x8x32xf32> to vector<8x32xf32>
    %80 = vector.shape_cast %76 : vector<8x32xf32> to vector<1x8x32xf32>
    tpu.vector_store %arg11[%77, %c0_32, %c0_33], %80 {strides = array<i32>} : memref<8x8x32xf32, #tpu.memory_space<vmem>>, vector<1x8x32xf32>,
    %c3_i32 = arith.constant 3 : i32
    %81 = arith.index_cast %c3_i32 : i32 to index
    %c0_34 = arith.constant 0 : index
    %c0_35 = arith.constant 0 : index
    %82 = vector.load %arg10[%81, %c0_34, %c0_35] : memref<8x8x128xf32, #tpu.memory_space<vmem>>, vector<1x8x128xf32>
    %83 = vector.shape_cast %82 : vector<1x8x128xf32> to vector<8x128xf32>
    %cst_36 = arith.constant dense<0.000000e+00> : vector<8x128xf32>
    %84 = tpu.matmul %76, %9, %cst_36 {dimension_numbers = #tpu.dot_dimension_numbers<[1], [0], [0], [1], [0, 0, 1, 1], [], []>} : vector<8x32xf32>, vector<32x128xf32>, vector<8x128xf32> -> vector<8x128xf32>
    %85 = arith.addf %83, %84 : vector<8x128xf32>
    %86 = math.tanh %85 : vector<8x128xf32>
    %cst_37 = arith.constant 5.000000e-01 : f32
    %87 = vector.broadcast %cst_37 : f32 to vector<8x128xf32>
    %88 = arith.mulf %86, %87 : vector<8x128xf32>
    %cst_38 = arith.constant 5.000000e-01 : f32
    %89 = vector.broadcast %cst_38 : f32 to vector<8x128xf32>
    %90 = arith.addf %88, %89 : vector<8x128xf32>
    %91 = vector.extract_strided_slice %90 {offsets = [0, 0], sizes = [8, 32], strides = [1, 1]} : vector<8x128xf32> to vector<8x32xf32>
    %92 = vector.extract_strided_slice %90 {offsets = [0, 32], sizes = [8, 32], strides = [1, 1]} : vector<8x128xf32> to vector<8x32xf32>
    %93 = vector.extract_strided_slice %86 {offsets = [0, 64], sizes = [8, 32], strides = [1, 1]} : vector<8x128xf32> to vector<8x32xf32>
    %94 = vector.extract_strided_slice %90 {offsets = [0, 96], sizes = [8, 32], strides = [1, 1]} : vector<8x128xf32> to vector<8x32xf32>
    %95 = arith.mulf %92, %74 : vector<8x32xf32>
    %96 = arith.mulf %91, %93 : vector<8x32xf32>
    %97 = arith.addf %95, %96 : vector<8x32xf32>
    %98 = math.tanh %97 : vector<8x32xf32>
    %99 = arith.mulf %94, %98 : vector<8x32xf32>
    %100 = arith.index_cast %c3_i32 : i32 to index
    %c0_39 = arith.constant 0 : index
    %c0_40 = arith.constant 0 : index
    %101 = vector.load %arg11[%100, %c0_39, %c0_40] : memref<8x8x32xf32, #tpu.memory_space<vmem>>, vector<1x8x32xf32>
    %102 = vector.shape_cast %101 : vector<1x8x32xf32> to vector<8x32xf32>
    %103 = vector.shape_cast %99 : vector<8x32xf32> to vector<1x8x32xf32>
    tpu.vector_store %arg11[%100, %c0_39, %c0_40], %103 {strides = array<i32>} : memref<8x8x32xf32, #tpu.memory_space<vmem>>, vector<1x8x32xf32>,
    %c4_i32 = arith.constant 4 : i32
    %104 = arith.index_cast %c4_i32 : i32 to index
    %c0_41 = arith.constant 0 : index
    %c0_42 = arith.constant 0 : index
    %105 = vector.load %arg10[%104, %c0_41, %c0_42] : memref<8x8x128xf32, #tpu.memory_space<vmem>>, vector<1x8x128xf32>
    %106 = vector.shape_cast %105 : vector<1x8x128xf32> to vector<8x128xf32>
    %cst_43 = arith.constant dense<0.000000e+00> : vector<8x128xf32>
    %107 = tpu.matmul %99, %9, %cst_43 {dimension_numbers = #tpu.dot_dimension_numbers<[1], [0], [0], [1], [0, 0, 1, 1], [], []>} : vector<8x32xf32>, vector<32x128xf32>, vector<8x128xf32> -> vector<8x128xf32>
    %108 = arith.addf %106, %107 : vector<8x128xf32>
    %109 = math.tanh %108 : vector<8x128xf32>
    %cst_44 = arith.constant 5.000000e-01 : f32
    %110 = vector.broadcast %cst_44 : f32 to vector<8x128xf32>
    %111 = arith.mulf %109, %110 : vector<8x128xf32>
    %cst_45 = arith.constant 5.000000e-01 : f32
    %112 = vector.broadcast %cst_45 : f32 to vector<8x128xf32>
    %113 = arith.addf %111, %112 : vector<8x128xf32>
    %114 = vector.extract_strided_slice %113 {offsets = [0, 0], sizes = [8, 32], strides = [1, 1]} : vector<8x128xf32> to vector<8x32xf32>
    %115 = vector.extract_strided_slice %113 {offsets = [0, 32], sizes = [8, 32], strides = [1, 1]} : vector<8x128xf32> to vector<8x32xf32>
    %116 = vector.extract_strided_slice %109 {offsets = [0, 64], sizes = [8, 32], strides = [1, 1]} : vector<8x128xf32> to vector<8x32xf32>
    %117 = vector.extract_strided_slice %113 {offsets = [0, 96], sizes = [8, 32], strides = [1, 1]} : vector<8x128xf32> to vector<8x32xf32>
    %118 = arith.mulf %115, %97 : vector<8x32xf32>
    %119 = arith.mulf %114, %116 : vector<8x32xf32>
    %120 = arith.addf %118, %119 : vector<8x32xf32>
    %121 = math.tanh %120 : vector<8x32xf32>
    %122 = arith.mulf %117, %121 : vector<8x32xf32>
    %123 = arith.index_cast %c4_i32 : i32 to index
    %c0_46 = arith.constant 0 : index
    %c0_47 = arith.constant 0 : index
    %124 = vector.load %arg11[%123, %c0_46, %c0_47] : memref<8x8x32xf32, #tpu.memory_space<vmem>>, vector<1x8x32xf32>
    %125 = vector.shape_cast %124 : vector<1x8x32xf32> to vector<8x32xf32>
    %126 = vector.shape_cast %122 : vector<8x32xf32> to vector<1x8x32xf32>
    tpu.vector_store %arg11[%123, %c0_46, %c0_47], %126 {strides = array<i32>} : memref<8x8x32xf32, #tpu.memory_space<vmem>>, vector<1x8x32xf32>,
    %c5_i32 = arith.constant 5 : i32
    %127 = arith.index_cast %c5_i32 : i32 to index
    %c0_48 = arith.constant 0 : index
    %c0_49 = arith.constant 0 : index
    %128 = vector.load %arg10[%127, %c0_48, %c0_49] : memref<8x8x128xf32, #tpu.memory_space<vmem>>, vector<1x8x128xf32>
    %129 = vector.shape_cast %128 : vector<1x8x128xf32> to vector<8x128xf32>
    %cst_50 = arith.constant dense<0.000000e+00> : vector<8x128xf32>
    %130 = tpu.matmul %122, %9, %cst_50 {dimension_numbers = #tpu.dot_dimension_numbers<[1], [0], [0], [1], [0, 0, 1, 1], [], []>} : vector<8x32xf32>, vector<32x128xf32>, vector<8x128xf32> -> vector<8x128xf32>
    %131 = arith.addf %129, %130 : vector<8x128xf32>
    %132 = math.tanh %131 : vector<8x128xf32>
    %cst_51 = arith.constant 5.000000e-01 : f32
    %133 = vector.broadcast %cst_51 : f32 to vector<8x128xf32>
    %134 = arith.mulf %132, %133 : vector<8x128xf32>
    %cst_52 = arith.constant 5.000000e-01 : f32
    %135 = vector.broadcast %cst_52 : f32 to vector<8x128xf32>
    %136 = arith.addf %134, %135 : vector<8x128xf32>
    %137 = vector.extract_strided_slice %136 {offsets = [0, 0], sizes = [8, 32], strides = [1, 1]} : vector<8x128xf32> to vector<8x32xf32>
    %138 = vector.extract_strided_slice %136 {offsets = [0, 32], sizes = [8, 32], strides = [1, 1]} : vector<8x128xf32> to vector<8x32xf32>
    %139 = vector.extract_strided_slice %132 {offsets = [0, 64], sizes = [8, 32], strides = [1, 1]} : vector<8x128xf32> to vector<8x32xf32>
    %140 = vector.extract_strided_slice %136 {offsets = [0, 96], sizes = [8, 32], strides = [1, 1]} : vector<8x128xf32> to vector<8x32xf32>
    %141 = arith.mulf %138, %120 : vector<8x32xf32>
    %142 = arith.mulf %137, %139 : vector<8x32xf32>
    %143 = arith.addf %141, %142 : vector<8x32xf32>
    %144 = math.tanh %143 : vector<8x32xf32>
    %145 = arith.mulf %140, %144 : vector<8x32xf32>
    %146 = arith.index_cast %c5_i32 : i32 to index
    %c0_53 = arith.constant 0 : index
    %c0_54 = arith.constant 0 : index
    %147 = vector.load %arg11[%146, %c0_53, %c0_54] : memref<8x8x32xf32, #tpu.memory_space<vmem>>, vector<1x8x32xf32>
    %148 = vector.shape_cast %147 : vector<1x8x32xf32> to vector<8x32xf32>
    %149 = vector.shape_cast %145 : vector<8x32xf32> to vector<1x8x32xf32>
    tpu.vector_store %arg11[%146, %c0_53, %c0_54], %149 {strides = array<i32>} : memref<8x8x32xf32, #tpu.memory_space<vmem>>, vector<1x8x32xf32>,
    %c6_i32 = arith.constant 6 : i32
    %150 = arith.index_cast %c6_i32 : i32 to index
    %c0_55 = arith.constant 0 : index
    %c0_56 = arith.constant 0 : index
    %151 = vector.load %arg10[%150, %c0_55, %c0_56] : memref<8x8x128xf32, #tpu.memory_space<vmem>>, vector<1x8x128xf32>
    %152 = vector.shape_cast %151 : vector<1x8x128xf32> to vector<8x128xf32>
    %cst_57 = arith.constant dense<0.000000e+00> : vector<8x128xf32>
    %153 = tpu.matmul %145, %9, %cst_57 {dimension_numbers = #tpu.dot_dimension_numbers<[1], [0], [0], [1], [0, 0, 1, 1], [], []>} : vector<8x32xf32>, vector<32x128xf32>, vector<8x128xf32> -> vector<8x128xf32>
    %154 = arith.addf %152, %153 : vector<8x128xf32>
    %155 = math.tanh %154 : vector<8x128xf32>
    %cst_58 = arith.constant 5.000000e-01 : f32
    %156 = vector.broadcast %cst_58 : f32 to vector<8x128xf32>
    %157 = arith.mulf %155, %156 : vector<8x128xf32>
    %cst_59 = arith.constant 5.000000e-01 : f32
    %158 = vector.broadcast %cst_59 : f32 to vector<8x128xf32>
    %159 = arith.addf %157, %158 : vector<8x128xf32>
    %160 = vector.extract_strided_slice %159 {offsets = [0, 0], sizes = [8, 32], strides = [1, 1]} : vector<8x128xf32> to vector<8x32xf32>
    %161 = vector.extract_strided_slice %159 {offsets = [0, 32], sizes = [8, 32], strides = [1, 1]} : vector<8x128xf32> to vector<8x32xf32>
    %162 = vector.extract_strided_slice %155 {offsets = [0, 64], sizes = [8, 32], strides = [1, 1]} : vector<8x128xf32> to vector<8x32xf32>
    %163 = vector.extract_strided_slice %159 {offsets = [0, 96], sizes = [8, 32], strides = [1, 1]} : vector<8x128xf32> to vector<8x32xf32>
    %164 = arith.mulf %161, %143 : vector<8x32xf32>
    %165 = arith.mulf %160, %162 : vector<8x32xf32>
    %166 = arith.addf %164, %165 : vector<8x32xf32>
    %167 = math.tanh %166 : vector<8x32xf32>
    %168 = arith.mulf %163, %167 : vector<8x32xf32>
    %169 = arith.index_cast %c6_i32 : i32 to index
    %c0_60 = arith.constant 0 : index
    %c0_61 = arith.constant 0 : index
    %170 = vector.load %arg11[%169, %c0_60, %c0_61] : memref<8x8x32xf32, #tpu.memory_space<vmem>>, vector<1x8x32xf32>
    %171 = vector.shape_cast %170 : vector<1x8x32xf32> to vector<8x32xf32>
    %172 = vector.shape_cast %168 : vector<8x32xf32> to vector<1x8x32xf32>
    tpu.vector_store %arg11[%169, %c0_60, %c0_61], %172 {strides = array<i32>} : memref<8x8x32xf32, #tpu.memory_space<vmem>>, vector<1x8x32xf32>,
    %c7_i32 = arith.constant 7 : i32
    %173 = arith.index_cast %c7_i32 : i32 to index
    %c0_62 = arith.constant 0 : index
    %c0_63 = arith.constant 0 : index
    %174 = vector.load %arg10[%173, %c0_62, %c0_63] : memref<8x8x128xf32, #tpu.memory_space<vmem>>, vector<1x8x128xf32>
    %175 = vector.shape_cast %174 : vector<1x8x128xf32> to vector<8x128xf32>
    %cst_64 = arith.constant dense<0.000000e+00> : vector<8x128xf32>
    %176 = tpu.matmul %168, %9, %cst_64 {dimension_numbers = #tpu.dot_dimension_numbers<[1], [0], [0], [1], [0, 0, 1, 1], [], []>} : vector<8x32xf32>, vector<32x128xf32>, vector<8x128xf32> -> vector<8x128xf32>
    %177 = arith.addf %175, %176 : vector<8x128xf32>
    %178 = math.tanh %177 : vector<8x128xf32>
    %cst_65 = arith.constant 5.000000e-01 : f32
    %179 = vector.broadcast %cst_65 : f32 to vector<8x128xf32>
    %180 = arith.mulf %178, %179 : vector<8x128xf32>
    %cst_66 = arith.constant 5.000000e-01 : f32
    %181 = vector.broadcast %cst_66 : f32 to vector<8x128xf32>
    %182 = arith.addf %180, %181 : vector<8x128xf32>
    %183 = vector.extract_strided_slice %182 {offsets = [0, 0], sizes = [8, 32], strides = [1, 1]} : vector<8x128xf32> to vector<8x32xf32>
    %184 = vector.extract_strided_slice %182 {offsets = [0, 32], sizes = [8, 32], strides = [1, 1]} : vector<8x128xf32> to vector<8x32xf32>
    %185 = vector.extract_strided_slice %178 {offsets = [0, 64], sizes = [8, 32], strides = [1, 1]} : vector<8x128xf32> to vector<8x32xf32>
    %186 = vector.extract_strided_slice %182 {offsets = [0, 96], sizes = [8, 32], strides = [1, 1]} : vector<8x128xf32> to vector<8x32xf32>
    %187 = arith.mulf %184, %166 : vector<8x32xf32>
    %188 = arith.mulf %183, %185 : vector<8x32xf32>
    %189 = arith.addf %187, %188 : vector<8x32xf32>
    %190 = math.tanh %189 : vector<8x32xf32>
    %191 = arith.mulf %186, %190 : vector<8x32xf32>
    %192 = arith.index_cast %c7_i32 : i32 to index
    %c0_67 = arith.constant 0 : index
    %c0_68 = arith.constant 0 : index
    %193 = vector.load %arg11[%192, %c0_67, %c0_68] : memref<8x8x32xf32, #tpu.memory_space<vmem>>, vector<1x8x32xf32>
    %194 = vector.shape_cast %193 : vector<1x8x32xf32> to vector<8x32xf32>
    %195 = vector.shape_cast %191 : vector<8x32xf32> to vector<1x8x32xf32>
    tpu.vector_store %arg11[%192, %c0_67, %c0_68], %195 {strides = array<i32>} : memref<8x8x32xf32, #tpu.memory_space<vmem>>, vector<1x8x32xf32>,
    %c8_i32 = arith.constant 8 : i32
    %c0_69 = arith.constant 0 : index
    %c0_70 = arith.constant 0 : index
    %c0_71 = arith.constant 0 : index
    %196 = vector.load %arg11[%c0_69, %c0_70, %c0_71] : memref<8x8x32xf32, #tpu.memory_space<vmem>>, vector<8x8x32xf32>
    %197 = vector.shape_cast %196 : vector<8x8x32xf32> to vector<64x32xf32>
    %c0_72 = arith.constant 0 : index
    %c0_73 = arith.constant 0 : index
    %198 = vector.load %arg4[%c0_72, %c0_73] : memref<32x128xf32, #tpu.memory_space<vmem>>, vector<32x128xf32>
    %cst_74 = arith.constant dense<0.000000e+00> : vector<64x128xf32>
    %199 = tpu.matmul %197, %198, %cst_74 {dimension_numbers = #tpu.dot_dimension_numbers<[1], [0], [0], [1], [0, 0, 1, 1], [], []>} : vector<64x32xf32>, vector<32x128xf32>, vector<64x128xf32> -> vector<64x128xf32>
    %c0_75 = arith.constant 0 : index
    %c0_76 = arith.constant 0 : index
    %200 = vector.load %arg6[%c0_75, %c0_76] : memref<1x128xf32, #tpu.memory_space<vmem>>, vector<1x128xf32>
    %201 = vector.broadcast %200 : vector<1x128xf32> to vector<64x128xf32>
    %202 = arith.addf %199, %201 : vector<64x128xf32>
    %203 = vector.shape_cast %202 : vector<64x128xf32> to vector<8x8x128xf32>
    %c0_77 = arith.constant 0 : index
    %c0_78 = arith.constant 0 : index
    %c0_79 = arith.constant 0 : index
    %204 = vector.load %arg10[%c0_77, %c0_78, %c0_79] : memref<8x8x128xf32, #tpu.memory_space<vmem>>, vector<8x8x128xf32>
    tpu.vector_store %arg10[%c0_77, %c0_78, %c0_79], %203 {strides = array<i32>} : memref<8x8x128xf32, #tpu.memory_space<vmem>>, vector<8x8x128xf32>,
    %c0_80 = arith.constant 0 : index
    %c0_81 = arith.constant 0 : index
    %205 = vector.load %arg5[%c0_80, %c0_81] : memref<32x128xf32, #tpu.memory_space<vmem>>, vector<32x128xf32>
    %cst_82 = arith.constant 0.000000e+00 : f32
    %206 = vector.broadcast %cst_82 : f32 to vector<8x32xf32>
    %cst_83 = arith.constant 0.000000e+00 : f32
    %207 = vector.broadcast %cst_83 : f32 to vector<8x32xf32>
    %c0_i32_84 = arith.constant 0 : i32
    %208 = arith.index_cast %c0_i32_84 : i32 to index
    %c0_85 = arith.constant 0 : index
    %c0_86 = arith.constant 0 : index
    %209 = vector.load %arg10[%208, %c0_85, %c0_86] : memref<8x8x128xf32, #tpu.memory_space<vmem>>, vector<1x8x128xf32>
    %210 = vector.shape_cast %209 : vector<1x8x128xf32> to vector<8x128xf32>
    %cst_87 = arith.constant dense<0.000000e+00> : vector<8x128xf32>
    %211 = tpu.matmul %206, %205, %cst_87 {dimension_numbers = #tpu.dot_dimension_numbers<[1], [0], [0], [1], [0, 0, 1, 1], [], []>} : vector<8x32xf32>, vector<32x128xf32>, vector<8x128xf32> -> vector<8x128xf32>
    %212 = arith.addf %210, %211 : vector<8x128xf32>
    %213 = math.tanh %212 : vector<8x128xf32>
    %cst_88 = arith.constant 5.000000e-01 : f32
    %214 = vector.broadcast %cst_88 : f32 to vector<8x128xf32>
    %215 = arith.mulf %213, %214 : vector<8x128xf32>
    %cst_89 = arith.constant 5.000000e-01 : f32
    %216 = vector.broadcast %cst_89 : f32 to vector<8x128xf32>
    %217 = arith.addf %215, %216 : vector<8x128xf32>
    %218 = vector.extract_strided_slice %217 {offsets = [0, 0], sizes = [8, 32], strides = [1, 1]} : vector<8x128xf32> to vector<8x32xf32>
    %219 = vector.extract_strided_slice %217 {offsets = [0, 32], sizes = [8, 32], strides = [1, 1]} : vector<8x128xf32> to vector<8x32xf32>
    %220 = vector.extract_strided_slice %213 {offsets = [0, 64], sizes = [8, 32], strides = [1, 1]} : vector<8x128xf32> to vector<8x32xf32>
    %221 = vector.extract_strided_slice %217 {offsets = [0, 96], sizes = [8, 32], strides = [1, 1]} : vector<8x128xf32> to vector<8x32xf32>
    %222 = arith.mulf %219, %207 : vector<8x32xf32>
    %223 = arith.mulf %218, %220 : vector<8x32xf32>
    %224 = arith.addf %222, %223 : vector<8x32xf32>
    %225 = math.tanh %224 : vector<8x32xf32>
    %226 = arith.mulf %221, %225 : vector<8x32xf32>
    %c1_i32_90 = arith.constant 1 : i32
    %227 = arith.index_cast %c1_i32_90 : i32 to index
    %c0_91 = arith.constant 0 : index
    %c0_92 = arith.constant 0 : index
    %228 = vector.load %arg10[%227, %c0_91, %c0_92] : memref<8x8x128xf32, #tpu.memory_space<vmem>>, vector<1x8x128xf32>
    %229 = vector.shape_cast %228 : vector<1x8x128xf32> to vector<8x128xf32>
    %cst_93 = arith.constant dense<0.000000e+00> : vector<8x128xf32>
    %230 = tpu.matmul %226, %205, %cst_93 {dimension_numbers = #tpu.dot_dimension_numbers<[1], [0], [0], [1], [0, 0, 1, 1], [], []>} : vector<8x32xf32>, vector<32x128xf32>, vector<8x128xf32> -> vector<8x128xf32>
    %231 = arith.addf %229, %230 : vector<8x128xf32>
    %232 = math.tanh %231 : vector<8x128xf32>
    %cst_94 = arith.constant 5.000000e-01 : f32
    %233 = vector.broadcast %cst_94 : f32 to vector<8x128xf32>
    %234 = arith.mulf %232, %233 : vector<8x128xf32>
    %cst_95 = arith.constant 5.000000e-01 : f32
    %235 = vector.broadcast %cst_95 : f32 to vector<8x128xf32>
    %236 = arith.addf %234, %235 : vector<8x128xf32>
    %237 = vector.extract_strided_slice %236 {offsets = [0, 0], sizes = [8, 32], strides = [1, 1]} : vector<8x128xf32> to vector<8x32xf32>
    %238 = vector.extract_strided_slice %236 {offsets = [0, 32], sizes = [8, 32], strides = [1, 1]} : vector<8x128xf32> to vector<8x32xf32>
    %239 = vector.extract_strided_slice %232 {offsets = [0, 64], sizes = [8, 32], strides = [1, 1]} : vector<8x128xf32> to vector<8x32xf32>
    %240 = vector.extract_strided_slice %236 {offsets = [0, 96], sizes = [8, 32], strides = [1, 1]} : vector<8x128xf32> to vector<8x32xf32>
    %241 = arith.mulf %238, %224 : vector<8x32xf32>
    %242 = arith.mulf %237, %239 : vector<8x32xf32>
    %243 = arith.addf %241, %242 : vector<8x32xf32>
    %244 = math.tanh %243 : vector<8x32xf32>
    %245 = arith.mulf %240, %244 : vector<8x32xf32>
    %c2_i32_96 = arith.constant 2 : i32
    %246 = arith.index_cast %c2_i32_96 : i32 to index
    %c0_97 = arith.constant 0 : index
    %c0_98 = arith.constant 0 : index
    %247 = vector.load %arg10[%246, %c0_97, %c0_98] : memref<8x8x128xf32, #tpu.memory_space<vmem>>, vector<1x8x128xf32>
    %248 = vector.shape_cast %247 : vector<1x8x128xf32> to vector<8x128xf32>
    %cst_99 = arith.constant dense<0.000000e+00> : vector<8x128xf32>
    %249 = tpu.matmul %245, %205, %cst_99 {dimension_numbers = #tpu.dot_dimension_numbers<[1], [0], [0], [1], [0, 0, 1, 1], [], []>} : vector<8x32xf32>, vector<32x128xf32>, vector<8x128xf32> -> vector<8x128xf32>
    %250 = arith.addf %248, %249 : vector<8x128xf32>
    %251 = math.tanh %250 : vector<8x128xf32>
    %cst_100 = arith.constant 5.000000e-01 : f32
    %252 = vector.broadcast %cst_100 : f32 to vector<8x128xf32>
    %253 = arith.mulf %251, %252 : vector<8x128xf32>
    %cst_101 = arith.constant 5.000000e-01 : f32
    %254 = vector.broadcast %cst_101 : f32 to vector<8x128xf32>
    %255 = arith.addf %253, %254 : vector<8x128xf32>
    %256 = vector.extract_strided_slice %255 {offsets = [0, 0], sizes = [8, 32], strides = [1, 1]} : vector<8x128xf32> to vector<8x32xf32>
    %257 = vector.extract_strided_slice %255 {offsets = [0, 32], sizes = [8, 32], strides = [1, 1]} : vector<8x128xf32> to vector<8x32xf32>
    %258 = vector.extract_strided_slice %251 {offsets = [0, 64], sizes = [8, 32], strides = [1, 1]} : vector<8x128xf32> to vector<8x32xf32>
    %259 = vector.extract_strided_slice %255 {offsets = [0, 96], sizes = [8, 32], strides = [1, 1]} : vector<8x128xf32> to vector<8x32xf32>
    %260 = arith.mulf %257, %243 : vector<8x32xf32>
    %261 = arith.mulf %256, %258 : vector<8x32xf32>
    %262 = arith.addf %260, %261 : vector<8x32xf32>
    %263 = math.tanh %262 : vector<8x32xf32>
    %264 = arith.mulf %259, %263 : vector<8x32xf32>
    %c3_i32_102 = arith.constant 3 : i32
    %265 = arith.index_cast %c3_i32_102 : i32 to index
    %c0_103 = arith.constant 0 : index
    %c0_104 = arith.constant 0 : index
    %266 = vector.load %arg10[%265, %c0_103, %c0_104] : memref<8x8x128xf32, #tpu.memory_space<vmem>>, vector<1x8x128xf32>
    %267 = vector.shape_cast %266 : vector<1x8x128xf32> to vector<8x128xf32>
    %cst_105 = arith.constant dense<0.000000e+00> : vector<8x128xf32>
    %268 = tpu.matmul %264, %205, %cst_105 {dimension_numbers = #tpu.dot_dimension_numbers<[1], [0], [0], [1], [0, 0, 1, 1], [], []>} : vector<8x32xf32>, vector<32x128xf32>, vector<8x128xf32> -> vector<8x128xf32>
    %269 = arith.addf %267, %268 : vector<8x128xf32>
    %270 = math.tanh %269 : vector<8x128xf32>
    %cst_106 = arith.constant 5.000000e-01 : f32
    %271 = vector.broadcast %cst_106 : f32 to vector<8x128xf32>
    %272 = arith.mulf %270, %271 : vector<8x128xf32>
    %cst_107 = arith.constant 5.000000e-01 : f32
    %273 = vector.broadcast %cst_107 : f32 to vector<8x128xf32>
    %274 = arith.addf %272, %273 : vector<8x128xf32>
    %275 = vector.extract_strided_slice %274 {offsets = [0, 0], sizes = [8, 32], strides = [1, 1]} : vector<8x128xf32> to vector<8x32xf32>
    %276 = vector.extract_strided_slice %274 {offsets = [0, 32], sizes = [8, 32], strides = [1, 1]} : vector<8x128xf32> to vector<8x32xf32>
    %277 = vector.extract_strided_slice %270 {offsets = [0, 64], sizes = [8, 32], strides = [1, 1]} : vector<8x128xf32> to vector<8x32xf32>
    %278 = vector.extract_strided_slice %274 {offsets = [0, 96], sizes = [8, 32], strides = [1, 1]} : vector<8x128xf32> to vector<8x32xf32>
    %279 = arith.mulf %276, %262 : vector<8x32xf32>
    %280 = arith.mulf %275, %277 : vector<8x32xf32>
    %281 = arith.addf %279, %280 : vector<8x32xf32>
    %282 = math.tanh %281 : vector<8x32xf32>
    %283 = arith.mulf %278, %282 : vector<8x32xf32>
    %c4_i32_108 = arith.constant 4 : i32
    %284 = arith.index_cast %c4_i32_108 : i32 to index
    %c0_109 = arith.constant 0 : index
    %c0_110 = arith.constant 0 : index
    %285 = vector.load %arg10[%284, %c0_109, %c0_110] : memref<8x8x128xf32, #tpu.memory_space<vmem>>, vector<1x8x128xf32>
    %286 = vector.shape_cast %285 : vector<1x8x128xf32> to vector<8x128xf32>
    %cst_111 = arith.constant dense<0.000000e+00> : vector<8x128xf32>
    %287 = tpu.matmul %283, %205, %cst_111 {dimension_numbers = #tpu.dot_dimension_numbers<[1], [0], [0], [1], [0, 0, 1, 1], [], []>} : vector<8x32xf32>, vector<32x128xf32>, vector<8x128xf32> -> vector<8x128xf32>
    %288 = arith.addf %286, %287 : vector<8x128xf32>
    %289 = math.tanh %288 : vector<8x128xf32>
    %cst_112 = arith.constant 5.000000e-01 : f32
    %290 = vector.broadcast %cst_112 : f32 to vector<8x128xf32>
    %291 = arith.mulf %289, %290 : vector<8x128xf32>
    %cst_113 = arith.constant 5.000000e-01 : f32
    %292 = vector.broadcast %cst_113 : f32 to vector<8x128xf32>
    %293 = arith.addf %291, %292 : vector<8x128xf32>
    %294 = vector.extract_strided_slice %293 {offsets = [0, 0], sizes = [8, 32], strides = [1, 1]} : vector<8x128xf32> to vector<8x32xf32>
    %295 = vector.extract_strided_slice %293 {offsets = [0, 32], sizes = [8, 32], strides = [1, 1]} : vector<8x128xf32> to vector<8x32xf32>
    %296 = vector.extract_strided_slice %289 {offsets = [0, 64], sizes = [8, 32], strides = [1, 1]} : vector<8x128xf32> to vector<8x32xf32>
    %297 = vector.extract_strided_slice %293 {offsets = [0, 96], sizes = [8, 32], strides = [1, 1]} : vector<8x128xf32> to vector<8x32xf32>
    %298 = arith.mulf %295, %281 : vector<8x32xf32>
    %299 = arith.mulf %294, %296 : vector<8x32xf32>
    %300 = arith.addf %298, %299 : vector<8x32xf32>
    %301 = math.tanh %300 : vector<8x32xf32>
    %302 = arith.mulf %297, %301 : vector<8x32xf32>
    %c5_i32_114 = arith.constant 5 : i32
    %303 = arith.index_cast %c5_i32_114 : i32 to index
    %c0_115 = arith.constant 0 : index
    %c0_116 = arith.constant 0 : index
    %304 = vector.load %arg10[%303, %c0_115, %c0_116] : memref<8x8x128xf32, #tpu.memory_space<vmem>>, vector<1x8x128xf32>
    %305 = vector.shape_cast %304 : vector<1x8x128xf32> to vector<8x128xf32>
    %cst_117 = arith.constant dense<0.000000e+00> : vector<8x128xf32>
    %306 = tpu.matmul %302, %205, %cst_117 {dimension_numbers = #tpu.dot_dimension_numbers<[1], [0], [0], [1], [0, 0, 1, 1], [], []>} : vector<8x32xf32>, vector<32x128xf32>, vector<8x128xf32> -> vector<8x128xf32>
    %307 = arith.addf %305, %306 : vector<8x128xf32>
    %308 = math.tanh %307 : vector<8x128xf32>
    %cst_118 = arith.constant 5.000000e-01 : f32
    %309 = vector.broadcast %cst_118 : f32 to vector<8x128xf32>
    %310 = arith.mulf %308, %309 : vector<8x128xf32>
    %cst_119 = arith.constant 5.000000e-01 : f32
    %311 = vector.broadcast %cst_119 : f32 to vector<8x128xf32>
    %312 = arith.addf %310, %311 : vector<8x128xf32>
    %313 = vector.extract_strided_slice %312 {offsets = [0, 0], sizes = [8, 32], strides = [1, 1]} : vector<8x128xf32> to vector<8x32xf32>
    %314 = vector.extract_strided_slice %312 {offsets = [0, 32], sizes = [8, 32], strides = [1, 1]} : vector<8x128xf32> to vector<8x32xf32>
    %315 = vector.extract_strided_slice %308 {offsets = [0, 64], sizes = [8, 32], strides = [1, 1]} : vector<8x128xf32> to vector<8x32xf32>
    %316 = vector.extract_strided_slice %312 {offsets = [0, 96], sizes = [8, 32], strides = [1, 1]} : vector<8x128xf32> to vector<8x32xf32>
    %317 = arith.mulf %314, %300 : vector<8x32xf32>
    %318 = arith.mulf %313, %315 : vector<8x32xf32>
    %319 = arith.addf %317, %318 : vector<8x32xf32>
    %320 = math.tanh %319 : vector<8x32xf32>
    %321 = arith.mulf %316, %320 : vector<8x32xf32>
    %c6_i32_120 = arith.constant 6 : i32
    %322 = arith.index_cast %c6_i32_120 : i32 to index
    %c0_121 = arith.constant 0 : index
    %c0_122 = arith.constant 0 : index
    %323 = vector.load %arg10[%322, %c0_121, %c0_122] : memref<8x8x128xf32, #tpu.memory_space<vmem>>, vector<1x8x128xf32>
    %324 = vector.shape_cast %323 : vector<1x8x128xf32> to vector<8x128xf32>
    %cst_123 = arith.constant dense<0.000000e+00> : vector<8x128xf32>
    %325 = tpu.matmul %321, %205, %cst_123 {dimension_numbers = #tpu.dot_dimension_numbers<[1], [0], [0], [1], [0, 0, 1, 1], [], []>} : vector<8x32xf32>, vector<32x128xf32>, vector<8x128xf32> -> vector<8x128xf32>
    %326 = arith.addf %324, %325 : vector<8x128xf32>
    %327 = math.tanh %326 : vector<8x128xf32>
    %cst_124 = arith.constant 5.000000e-01 : f32
    %328 = vector.broadcast %cst_124 : f32 to vector<8x128xf32>
    %329 = arith.mulf %327, %328 : vector<8x128xf32>
    %cst_125 = arith.constant 5.000000e-01 : f32
    %330 = vector.broadcast %cst_125 : f32 to vector<8x128xf32>
    %331 = arith.addf %329, %330 : vector<8x128xf32>
    %332 = vector.extract_strided_slice %331 {offsets = [0, 0], sizes = [8, 32], strides = [1, 1]} : vector<8x128xf32> to vector<8x32xf32>
    %333 = vector.extract_strided_slice %331 {offsets = [0, 32], sizes = [8, 32], strides = [1, 1]} : vector<8x128xf32> to vector<8x32xf32>
    %334 = vector.extract_strided_slice %327 {offsets = [0, 64], sizes = [8, 32], strides = [1, 1]} : vector<8x128xf32> to vector<8x32xf32>
    %335 = vector.extract_strided_slice %331 {offsets = [0, 96], sizes = [8, 32], strides = [1, 1]} : vector<8x128xf32> to vector<8x32xf32>
    %336 = arith.mulf %333, %319 : vector<8x32xf32>
    %337 = arith.mulf %332, %334 : vector<8x32xf32>
    %338 = arith.addf %336, %337 : vector<8x32xf32>
    %339 = math.tanh %338 : vector<8x32xf32>
    %340 = arith.mulf %335, %339 : vector<8x32xf32>
    %c7_i32_126 = arith.constant 7 : i32
    %341 = arith.index_cast %c7_i32_126 : i32 to index
    %c0_127 = arith.constant 0 : index
    %c0_128 = arith.constant 0 : index
    %342 = vector.load %arg10[%341, %c0_127, %c0_128] : memref<8x8x128xf32, #tpu.memory_space<vmem>>, vector<1x8x128xf32>
    %343 = vector.shape_cast %342 : vector<1x8x128xf32> to vector<8x128xf32>
    %cst_129 = arith.constant dense<0.000000e+00> : vector<8x128xf32>
    %344 = tpu.matmul %340, %205, %cst_129 {dimension_numbers = #tpu.dot_dimension_numbers<[1], [0], [0], [1], [0, 0, 1, 1], [], []>} : vector<8x32xf32>, vector<32x128xf32>, vector<8x128xf32> -> vector<8x128xf32>
    %345 = arith.addf %343, %344 : vector<8x128xf32>
    %346 = math.tanh %345 : vector<8x128xf32>
    %cst_130 = arith.constant 5.000000e-01 : f32
    %347 = vector.broadcast %cst_130 : f32 to vector<8x128xf32>
    %348 = arith.mulf %346, %347 : vector<8x128xf32>
    %cst_131 = arith.constant 5.000000e-01 : f32
    %349 = vector.broadcast %cst_131 : f32 to vector<8x128xf32>
    %350 = arith.addf %348, %349 : vector<8x128xf32>
    %351 = vector.extract_strided_slice %350 {offsets = [0, 0], sizes = [8, 32], strides = [1, 1]} : vector<8x128xf32> to vector<8x32xf32>
    %352 = vector.extract_strided_slice %350 {offsets = [0, 32], sizes = [8, 32], strides = [1, 1]} : vector<8x128xf32> to vector<8x32xf32>
    %353 = vector.extract_strided_slice %346 {offsets = [0, 64], sizes = [8, 32], strides = [1, 1]} : vector<8x128xf32> to vector<8x32xf32>
    %354 = vector.extract_strided_slice %350 {offsets = [0, 96], sizes = [8, 32], strides = [1, 1]} : vector<8x128xf32> to vector<8x32xf32>
    %355 = arith.mulf %352, %338 : vector<8x32xf32>
    %356 = arith.mulf %351, %353 : vector<8x32xf32>
    %357 = arith.addf %355, %356 : vector<8x32xf32>
    %358 = math.tanh %357 : vector<8x32xf32>
    %359 = arith.mulf %354, %358 : vector<8x32xf32>
    %c8_i32_132 = arith.constant 8 : i32
    %c0_133 = arith.constant 0 : index
    %c0_134 = arith.constant 0 : index
    %360 = vector.load %arg7[%c0_133, %c0_134] : memref<32x4xf32, #tpu.memory_space<vmem>>, vector<32x4xf32>
    %cst_135 = arith.constant dense<0.000000e+00> : vector<8x4xf32>
    %361 = tpu.matmul %359, %360, %cst_135 {dimension_numbers = #tpu.dot_dimension_numbers<[1], [0], [0], [1], [0, 0, 1, 1], [], []>} : vector<8x32xf32>, vector<32x4xf32>, vector<8x4xf32> -> vector<8x4xf32>
    %c0_136 = arith.constant 0 : index
    %c0_137 = arith.constant 0 : index
    %362 = vector.load %arg8[%c0_136, %c0_137] : memref<1x4xf32, #tpu.memory_space<vmem>>, vector<1x4xf32>
    %363 = vector.broadcast %362 : vector<1x4xf32> to vector<8x4xf32>
    %364 = arith.addf %361, %363 : vector<8x4xf32>
    %c0_138 = arith.constant 0 : index
    %c0_139 = arith.constant 0 : index
    %365 = vector.load %arg9[%c0_138, %c0_139] : memref<8x4xf32, #tpu.memory_space<vmem>>, vector<8x4xf32>
    tpu.vector_store %arg9[%c0_138, %c0_139], %364 {strides = array<i32>} : memref<8x4xf32, #tpu.memory_space<vmem>>, vector<8x4xf32>,
    return
  }
}

</mosaic_0001>

<llo_original>
// kernel: lstm_model_forward.1
$region0: #{lstm_model_forward.1}
  #allocation0 [shape = 'u32[]', space=smem, size = 0x4, offset = 0x4, fixed_abs, tag = 'smem constant byte address 0x4 - core index']
  #allocation1 [shape = 'u32[72,128]{1,0:T(1,128)}', space=vmem, size = 0x9000, scoped, tag = 'internal scratch']
  #allocation2 [shape = 'f32[8,8,128]{2,1,0:T(8,128)}', space=vmem, size = 0x8000, scoped, tag = 'scratch operand']
  #allocation3 [shape = 'f32[8,8,32]{2,1,0:T(8,128)}', space=vmem, size = 0x8000, scoped, tag = 'scratch operand']
  %s0 = inlined_call_operand.vmem [shape: f32[8,8,16], index: 0, kind: input, shape index: {}]
  %s1 = inlined_call_operand.vmem [shape: f32[16,128], index: 1, kind: input, shape index: {}]
  %s2 = inlined_call_operand.vmem [shape: f32[32,128], index: 2, kind: input, shape index: {}]
  %s3 = inlined_call_operand.vmem [shape: f32[1,128], index: 3, kind: input, shape index: {}]
  %s4 = inlined_call_operand.vmem [shape: f32[32,128], index: 4, kind: input, shape index: {}]
  %s5 = inlined_call_operand.vmem [shape: f32[32,128], index: 5, kind: input, shape index: {}]
  %s6 = inlined_call_operand.vmem [shape: f32[1,128], index: 6, kind: input, shape index: {}]
  %s7 = inlined_call_operand.hbm [shape: f32[32,4], index: 7, kind: input, shape index: {}]
  %s8 = inlined_call_operand.hbm [shape: f32[1,4], index: 8, kind: input, shape index: {}]
  %s9 = inlined_call_operand.vmem [shape: f32[8,4], index: 9, kind: output, shape index: {}]
  %s10 = sld [smem:[#allocation0]]
  $region54: #{lstm_model_forward.1} parent=0
    _
  %s12 = ssub.s32 1, %s10
  %s13 = scalar_select 0, %s12, %s10
  $region1: #{lstm_model_forward.1} parent=0
    #allocation4 [shape = 'u8[16384]{0}', space=vmem, size = 0x4000, scoped, tag = 'input window, operand 7, single buffered']
    #allocation5 [shape = 's32[1]{0}', space=sflag, size = 0x4, scoped, tag = 'scoped memory for lstm_model_forward.1']
    #allocation6 [shape = 'u8[512]{0}', space=vmem, size = 0x400, scoped, tag = 'input window, operand 8, single buffered']
    #allocation7 [shape = 's32[1]{0}', space=sflag, size = 0x4, scoped, tag = 'scoped memory for lstm_model_forward.1']
    %14 = vsyncpa [#allocation5], 0
    %15 = vsyncpa [#allocation7], 0
    // Predicated region
    $region2: #{lstm_model_forward.1} parent=1 // pred_check
      _
    $region3: #{lstm_model_forward.1} parent=1 // pred_check_branch
      %17 = sbr.rel (0) target = $region5
    $region4: #{lstm_model_forward.1} parent=1 // pred_region
      _
    $region5: #{lstm_model_forward.1} parent=1 // pred_fallthru
      _
    // Predicated region
    $region6: #{lstm_model_forward.1} parent=1 // pred_check
      _
    $region7: #{lstm_model_forward.1} parent=1 // pred_check_branch
      %19 = sbr.rel (0) target = $region9
    $region8: #{lstm_model_forward.1} parent=1 // pred_region
      _
    $region9: #{lstm_model_forward.1} parent=1 // pred_fallthru
      _
    // Predicated region
    $region10: #{lstm_model_forward.1} parent=1 // pred_check
      _
    $region11: #{lstm_model_forward.1} parent=1 // pred_check_branch
      %21 = sbr.rel (0) target = $region13
    $region12: #{lstm_model_forward.1} parent=1 // pred_region
      _
    $region13: #{lstm_model_forward.1} parent=1 // pred_fallthru
      _
    // Predicated region
    $region14: #{lstm_model_forward.1} parent=1 // pred_check
      _
    $region15: #{lstm_model_forward.1} parent=1 // pred_check_branch
      %23 = sbr.rel (0) target = $region17
    $region16: #{lstm_model_forward.1} parent=1 // pred_region
      _
    $region17: #{lstm_model_forward.1} parent=1 // pred_fallthru
      _
    // Predicated region
    $region18: #{lstm_model_forward.1} parent=1 // pred_check
      _
    $region19: #{lstm_model_forward.1} parent=1 // pred_check_branch
      %25 = sbr.rel (0) target = $region21
    $region20: #{lstm_model_forward.1} parent=1 // pred_region
      _
    $region21: #{lstm_model_forward.1} parent=1 // pred_fallthru
      _
    // Predicated region
    $region22: #{lstm_model_forward.1} parent=1 // pred_check
      _
    $region23: #{lstm_model_forward.1} parent=1 // pred_check_branch
      %27 = sbr.rel (0) target = $region25
    $region24: #{lstm_model_forward.1} parent=1 // pred_region
      _
    $region25: #{lstm_model_forward.1} parent=1 // pred_fallthru
      _
    // Predicated region
    $region26: #{lstm_model_forward.1} parent=1 // pred_check
      _
    $region27: #{lstm_model_forward.1} parent=1 // pred_check_branch
      %29 = sbr.rel (0) target = $region29
    $region28: #{lstm_model_forward.1} parent=1 // pred_region
      _
    $region29: #{lstm_model_forward.1} parent=1 // pred_fallthru
      _
    // Predicated region
    $region30: #{lstm_model_forward.1} parent=1 // pred_check
      _
    $region31: #{lstm_model_forward.1} parent=1 // pred_check_branch
      %31 = sbr.rel (0) target = $region33
    $region32: #{lstm_model_forward.1} parent=1 // pred_region
      %33 = vsyncadd [#allocation5], 0
      %s34 = sshll.u32 %s7, 4
      %s35 = int_to_ptr.hbm [resolvable:$true] %s34
      %s36 = sshll.u32 [#allocation4], 4
      %s37 = int_to_ptr.vmem [resolvable:$true] %s36
      %42 = dma.hbm_to_vmem [thread:$0]  %s35, 512, %s37, [#allocation5], 128, 128, 8
    $region33: #{lstm_model_forward.1} parent=1 // pred_fallthru
      _
    // Predicated region
    $region34: #{lstm_model_forward.1} parent=1 // pred_check
      _
    $region35: #{lstm_model_forward.1} parent=1 // pred_check_branch
      %44 = sbr.rel (0) target = $region37
    $region36: #{lstm_model_forward.1} parent=1 // pred_region
      %46 = vsyncadd [#allocation7], 0
      %s48 = sshll.u32 %s8, 4
      %s49 = int_to_ptr.hbm [resolvable:$true] %s48
      %s50 = sshll.u32 [#allocation6], 4
      %s51 = int_to_ptr.vmem [resolvable:$true] %s50
      %53 = dma.hbm_to_vmem [thread:$0]  %s49, 16, %s51, [#allocation7]
    $region37: #{lstm_model_forward.1} parent=1 // pred_fallthru
      _
    // Predicated region
    $region38: #{lstm_model_forward.1} parent=1 // pred_check
      _
    $region39: #{lstm_model_forward.1} parent=1 // pred_check_branch
      %55 = sbr.rel (0) target = $region41
    $region40: #{lstm_model_forward.1} parent=1 // pred_region
      %57 = dma.done [#allocation5], 512
    $region41: #{lstm_model_forward.1} parent=1 // pred_fallthru
      _
    // Predicated region
    $region42: #{lstm_model_forward.1} parent=1 // pred_check
      _
    $region43: #{lstm_model_forward.1} parent=1 // pred_check_branch
      %59 = sbr.rel (0) target = $region45
    $region44: #{lstm_model_forward.1} parent=1 // pred_region
      %61 = dma.done [#allocation7], 16
    $region45: #{lstm_model_forward.1} parent=1 // pred_fallthru
      _
    %v62 = vld [vmem:[%s0] sm:$0xff]
    %v63 = vld [vmem:[%s0 + $0x8] sm:$0xff]
    %v64 = vld [vmem:[%s0 + $0x10] sm:$0xff]
    %v65 = vld [vmem:[%s0 + $0x18] sm:$0xff]
    %v66 = vld [vmem:[%s0 + $0x20] sm:$0xff]
    %v67 = vld [vmem:[%s0 + $0x28] sm:$0xff]
    %v68 = vld [vmem:[%s0 + $0x30] sm:$0xff]
    %v69 = vld [vmem:[%s0 + $0x38] sm:$0xff]
    %v70 = vld [vmem:[%s1] sm:$0xff]
    %v71 = vld [vmem:[%s1 + $0x8] sm:$0xff]
    %v72 = vld [vmem:[%s3] sm:$0x1]
    %v74 = vperm.slane %v72, 0
    %vm76 = vcmask 130048
    %v78 = vsel %vm76, %v62, 0
    %v81 = vsel %vm76, %v63, 0
    %v84 = vsel %vm76, %v64, 0
    %v87 = vsel %vm76, %v65, 0
    %v90 = vsel %vm76, %v66, 0
    %v93 = vsel %vm76, %v67, 0
    %v96 = vsel %vm76, %v68, 0
    %v99 = vsel %vm76, %v69, 0
    %101 = vmatpush.msra.mxu0 0.0
    %102 = vmatpush.msra.mxu0 0.0
    %103 = vmatpush.msra.mxu0 0.0
    %104 = vmatpush.msra.mxu0 0.0
    %105 = vmatpush.msra.mxu0 0.0
    %106 = vmatpush.msra.mxu0 0.0
    %107 = vmatpush.msra.mxu0 0.0
    %108 = vmatpush.msra.mxu0 0.0
    %109 = vmatpush.msra.mxu0 0.0
    %110 = vmatpush.msra.mxu0 0.0
    %111 = vmatpush.msra.mxu0 0.0
    %112 = vmatpush.msra.mxu0 0.0
    %113 = vmatpush.msra.mxu0 0.0
    %114 = vmatpush.msra.mxu0 0.0
    %115 = vmatpush.msra.mxu0 %v71
    %116 = vmatpush.msra.mxu0 %v70
    %117 = vmatmul.f32.gmra.mxu0 %v78
    %v118 = vpop.f32.mrf.mxu0
    %v119 = vadd.f32 %v74, %v118
    %120 = vmatmul.f32.gmra.mxu0 %v81
    %v121 = vpop.f32.mrf.mxu0
    %v122 = vadd.f32 %v74, %v121
    %123 = vmatmul.f32.gmra.mxu0 %v84
    %v124 = vpop.f32.mrf.mxu0
    %v125 = vadd.f32 %v74, %v124
    %126 = vmatmul.f32.gmra.mxu0 %v87
    %v127 = vpop.f32.mrf.mxu0
    %v128 = vadd.f32 %v74, %v127
    %129 = vmatmul.f32.gmra.mxu0 %v90
    %v130 = vpop.f32.mrf.mxu0
    %v131 = vadd.f32 %v74, %v130
    %132 = vmatmul.f32.gmra.mxu0 %v93
    %v133 = vpop.f32.mrf.mxu0
    %v134 = vadd.f32 %v74, %v133
    %135 = vmatmul.f32.gmra.mxu0 %v96
    %v136 = vpop.f32.mrf.mxu0
    %v137 = vadd.f32 %v74, %v136
    %138 = vmatmul.f32.gmra.mxu0 %v99
    %v139 = vpop.f32.mrf.mxu0
    %v140 = vadd.f32 %v74, %v139
    %141 = vdwg.mxu0
    %142 = vst [vmem:[#allocation2] sm:$0xff] %v119
    %143 = vst [vmem:[#allocation2 + $0x8] sm:$0xff] %v122
    %144 = vst [vmem:[#allocation2 + $0x10] sm:$0xff] %v125
    %145 = vst [vmem:[#allocation2 + $0x18] sm:$0xff] %v128
    %146 = vst [vmem:[#allocation2 + $0x20] sm:$0xff] %v131
    %147 = vst [vmem:[#allocation2 + $0x28] sm:$0xff] %v134
    %148 = vst [vmem:[#allocation2 + $0x30] sm:$0xff] %v137
    %149 = vst [vmem:[#allocation2 + $0x38] sm:$0xff] %v140
    %v150 = vld [vmem:[%s2] sm:$0xff]
    %v151 = vld [vmem:[%s2 + $0x8] sm:$0xff]
    %v152 = vld [vmem:[%s2 + $0x10] sm:$0xff]
    %v153 = vld [vmem:[%s2 + $0x18] sm:$0xff]
    %v154 = vld [vmem:[#allocation2] sm:$0xff]
    %vm155 = vcmask 261120
    %v157 = vsel %vm155, 0.0, 0
    %159 = vmatpush.msra.mxu0 0.0
    %160 = vmatpush.msra.mxu0 0.0
    %161 = vmatpush.msra.mxu0 0.0
    %162 = vmatpush.msra.mxu0 0.0
    %163 = vmatpush.msra.mxu0 0.0
    %164 = vmatpush.msra.mxu0 0.0
    %165 = vmatpush.msra.mxu0 0.0
    %166 = vmatpush.msra.mxu0 0.0
    %167 = vmatpush.msra.mxu0 0.0
    %168 = vmatpush.msra.mxu0 0.0
    %169 = vmatpush.msra.mxu0 0.0
    %170 = vmatpush.msra.mxu0 0.0
    %171 = vmatpush.msra.mxu0 %v153
    %172 = vmatpush.msra.mxu0 %v152
    %173 = vmatpush.msra.mxu0 %v151
    %174 = vmatpush.msra.mxu0 %v150
    %175 = vmatmul.f32.gmra.mxu0 %v157
    %v176 = vpop.f32.mrf.mxu0
    %v177 = vadd.f32 0.0, %v176
    %178 = vdwg.mxu0
    %v179 = vadd.f32 %v154, %v177
    %v180 = vtanh.pop %v179
    %v181 = vmul.f32 %v180, 0.5
    %v182 = vadd.f32 %v181, 0.5
    %v183 = vmul.f32 %v182, 0.0
    %185 = vrot.lane.b32.xlu0 %v180, 64
    %v186 = vpop.permute.xlu0 %185
    %v188 = vmul.f32 %v182, %v186
    %190 = vrot.lane.b32.xlu0 %v188, 32
    %v191 = vpop.permute.xlu0 %190
    %v193 = vadd.f32 %v183, %v191
    %v194 = vtanh.pop %v193
    %196 = vrot.lane.b32.xlu0 %v194, 64
    %v197 = vpop.permute.xlu0 %196
    %v199 = vmul.f32 %v182, %v197
    %201 = vrot.lane.b32.xlu0 %v199, 32
    %v202 = vpop.permute.xlu0 %201
    %204 = vst.msk [vmem:[#allocation3] sm:$0xff] %vm155, %v202
    %s205 = scalar_lea.vmem [#allocation2], 8
    %v206 = vld [vmem:[%s205] sm:$0xff]
    %v207 = vsel %vm155, %v202, 0
    %209 = vmatpush.msra.mxu0 0.0
    %210 = vmatpush.msra.mxu0 0.0
    %211 = vmatpush.msra.mxu0 0.0
    %212 = vmatpush.msra.mxu0 0.0
    %213 = vmatpush.msra.mxu0 0.0
    %214 = vmatpush.msra.mxu0 0.0
    %215 = vmatpush.msra.mxu0 0.0
    %216 = vmatpush.msra.mxu0 0.0
    %217 = vmatpush.msra.mxu0 0.0
    %218 = vmatpush.msra.mxu0 0.0
    %219 = vmatpush.msra.mxu0 0.0
    %220 = vmatpush.msra.mxu0 0.0
    %221 = vmatpush.msra.mxu0 %v153
    %222 = vmatpush.msra.mxu0 %v152
    %223 = vmatpush.msra.mxu0 %v151
    %224 = vmatpush.msra.mxu0 %v150
    %225 = vmatmul.f32.gmra.mxu0 %v207
    %v226 = vpop.f32.mrf.mxu0
    %v227 = vadd.f32 0.0, %v226
    %228 = vdwg.mxu0
    %v229 = vadd.f32 %v206, %v227
    %v230 = vtanh.pop %v229
    %v231 = vmul.f32 %v230, 0.5
    %v232 = vadd.f32 %v231, 0.5
    %v233 = vmul.f32 %v232, %v193
    %235 = vrot.lane.b32.xlu0 %v230, 64
    %v236 = vpop.permute.xlu0 %235
    %v238 = vmul.f32 %v232, %v236
    %240 = vrot.lane.b32.xlu0 %v238, 32
    %v241 = vpop.permute.xlu0 %240
    %v243 = vadd.f32 %v233, %v241
    %v244 = vtanh.pop %v243
    %246 = vrot.lane.b32.xlu0 %v244, 64
    %v247 = vpop.permute.xlu0 %246
    %v249 = vmul.f32 %v232, %v247
    %251 = vrot.lane.b32.xlu0 %v249, 32
    %v252 = vpop.permute.xlu0 %251
    %s254 = scalar_lea.vmem [#allocation3], 8
    %255 = vst.msk [vmem:[%s254] sm:$0xff] %vm155, %v252
    %s256 = scalar_lea.vmem [#allocation2], 16
    %v257 = vld [vmem:[%s256] sm:$0xff]
    %v258 = vsel %vm155, %v252, 0
    %260 = vmatpush.msra.mxu0 0.0
    %261 = vmatpush.msra.mxu0 0.0
    %262 = vmatpush.msra.mxu0 0.0
    %263 = vmatpush.msra.mxu0 0.0
    %264 = vmatpush.msra.mxu0 0.0
    %265 = vmatpush.msra.mxu0 0.0
    %266 = vmatpush.msra.mxu0 0.0
    %267 = vmatpush.msra.mxu0 0.0
    %268 = vmatpush.msra.mxu0 0.0
    %269 = vmatpush.msra.mxu0 0.0
    %270 = vmatpush.msra.mxu0 0.0
    %271 = vmatpush.msra.mxu0 0.0
    %272 = vmatpush.msra.mxu0 %v153
    %273 = vmatpush.msra.mxu0 %v152
    %274 = vmatpush.msra.mxu0 %v151
    %275 = vmatpush.msra.mxu0 %v150
    %276 = vmatmul.f32.gmra.mxu0 %v258
    %v277 = vpop.f32.mrf.mxu0
    %v278 = vadd.f32 0.0, %v277
    %279 = vdwg.mxu0
    %v280 = vadd.f32 %v257, %v278
    %v281 = vtanh.pop %v280
    %v282 = vmul.f32 %v281, 0.5
    %v283 = vadd.f32 %v282, 0.5
    %v284 = vmul.f32 %v283, %v243
    %286 = vrot.lane.b32.xlu0 %v281, 64
    %v287 = vpop.permute.xlu0 %286
    %v289 = vmul.f32 %v283, %v287
    %291 = vrot.lane.b32.xlu0 %v289, 32
    %v292 = vpop.permute.xlu0 %291
    %v294 = vadd.f32 %v284, %v292
    %v295 = vtanh.pop %v294
    %297 = vrot.lane.b32.xlu0 %v295, 64
    %v298 = vpop.permute.xlu0 %297
    %v300 = vmul.f32 %v283, %v298
    %302 = vrot.lane.b32.xlu0 %v300, 32
    %v303 = vpop.permute.xlu0 %302
    %s305 = scalar_lea.vmem [#allocation3], 16
    %306 = vst.msk [vmem:[%s305] sm:$0xff] %vm155, %v303
    %s307 = scalar_lea.vmem [#allocation2], 24
    %v308 = vld [vmem:[%s307] sm:$0xff]
    %v309 = vsel %vm155, %v303, 0
    %311 = vmatpush.msra.mxu0 0.0
    %312 = vmatpush.msra.mxu0 0.0
    %313 = vmatpush.msra.mxu0 0.0
    %314 = vmatpush.msra.mxu0 0.0
    %315 = vmatpush.msra.mxu0 0.0
    %316 = vmatpush.msra.mxu0 0.0
    %317 = vmatpush.msra.mxu0 0.0
    %318 = vmatpush.msra.mxu0 0.0
    %319 = vmatpush.msra.mxu0 0.0
    %320 = vmatpush.msra.mxu0 0.0
    %321 = vmatpush.msra.mxu0 0.0
    %322 = vmatpush.msra.mxu0 0.0
    %323 = vmatpush.msra.mxu0 %v153
    %324 = vmatpush.msra.mxu0 %v152
    %325 = vmatpush.msra.mxu0 %v151
    %326 = vmatpush.msra.mxu0 %v150
    %327 = vmatmul.f32.gmra.mxu0 %v309
    %v328 = vpop.f32.mrf.mxu0
    %v329 = vadd.f32 0.0, %v328
    %330 = vdwg.mxu0
    %v331 = vadd.f32 %v308, %v329
    %v332 = vtanh.pop %v331
    %v333 = vmul.f32 %v332, 0.5
    %v334 = vadd.f32 %v333, 0.5
    %v335 = vmul.f32 %v334, %v294
    %337 = vrot.lane.b32.xlu0 %v332, 64
    %v338 = vpop.permute.xlu0 %337
    %v340 = vmul.f32 %v334, %v338
    %342 = vrot.lane.b32.xlu0 %v340, 32
    %v343 = vpop.permute.xlu0 %342
    %v345 = vadd.f32 %v335, %v343
    %v346 = vtanh.pop %v345
    %348 = vrot.lane.b32.xlu0 %v346, 64
    %v349 = vpop.permute.xlu0 %348
    %v351 = vmul.f32 %v334, %v349
    %353 = vrot.lane.b32.xlu0 %v351, 32
    %v354 = vpop.permute.xlu0 %353
    %s356 = scalar_lea.vmem [#allocation3], 24
    %357 = vst.msk [vmem:[%s356] sm:$0xff] %vm155, %v354
    %s358 = scalar_lea.vmem [#allocation2], 32
    %v359 = vld [vmem:[%s358] sm:$0xff]
    %v360 = vsel %vm155, %v354, 0
    %362 = vmatpush.msra.mxu0 0.0
    %363 = vmatpush.msra.mxu0 0.0
    %364 = vmatpush.msra.mxu0 0.0
    %365 = vmatpush.msra.mxu0 0.0
    %366 = vmatpush.msra.mxu0 0.0
    %367 = vmatpush.msra.mxu0 0.0
    %368 = vmatpush.msra.mxu0 0.0
    %369 = vmatpush.msra.mxu0 0.0
    %370 = vmatpush.msra.mxu0 0.0
    %371 = vmatpush.msra.mxu0 0.0
    %372 = vmatpush.msra.mxu0 0.0
    %373 = vmatpush.msra.mxu0 0.0
    %374 = vmatpush.msra.mxu0 %v153
    %375 = vmatpush.msra.mxu0 %v152
    %376 = vmatpush.msra.mxu0 %v151
    %377 = vmatpush.msra.mxu0 %v150
    %378 = vmatmul.f32.gmra.mxu0 %v360
    %v379 = vpop.f32.mrf.mxu0
    %v380 = vadd.f32 0.0, %v379
    %381 = vdwg.mxu0
    %v382 = vadd.f32 %v359, %v380
    %v383 = vtanh.pop %v382
    %v384 = vmul.f32 %v383, 0.5
    %v385 = vadd.f32 %v384, 0.5
    %v386 = vmul.f32 %v385, %v345
    %388 = vrot.lane.b32.xlu0 %v383, 64
    %v389 = vpop.permute.xlu0 %388
    %v391 = vmul.f32 %v385, %v389
    %393 = vrot.lane.b32.xlu0 %v391, 32
    %v394 = vpop.permute.xlu0 %393
    %v396 = vadd.f32 %v386, %v394
    %v397 = vtanh.pop %v396
    %399 = vrot.lane.b32.xlu0 %v397, 64
    %v400 = vpop.permute.xlu0 %399
    %v402 = vmul.f32 %v385, %v400
    %404 = vrot.lane.b32.xlu0 %v402, 32
    %v405 = vpop.permute.xlu0 %404
    %s407 = scalar_lea.vmem [#allocation3], 32
    %408 = vst.msk [vmem:[%s407] sm:$0xff] %vm155, %v405
    %s409 = scalar_lea.vmem [#allocation2], 40
    %v410 = vld [vmem:[%s409] sm:$0xff]
    %v411 = vsel %vm155, %v405, 0
    %413 = vmatpush.msra.mxu0 0.0
    %414 = vmatpush.msra.mxu0 0.0
    %415 = vmatpush.msra.mxu0 0.0
    %416 = vmatpush.msra.mxu0 0.0
    %417 = vmatpush.msra.mxu0 0.0
    %418 = vmatpush.msra.mxu0 0.0
    %419 = vmatpush.msra.mxu0 0.0
    %420 = vmatpush.msra.mxu0 0.0
    %421 = vmatpush.msra.mxu0 0.0
    %422 = vmatpush.msra.mxu0 0.0
    %423 = vmatpush.msra.mxu0 0.0
    %424 = vmatpush.msra.mxu0 0.0
    %425 = vmatpush.msra.mxu0 %v153
    %426 = vmatpush.msra.mxu0 %v152
    %427 = vmatpush.msra.mxu0 %v151
    %428 = vmatpush.msra.mxu0 %v150
    %429 = vmatmul.f32.gmra.mxu0 %v411
    %v430 = vpop.f32.mrf.mxu0
    %v431 = vadd.f32 0.0, %v430
    %432 = vdwg.mxu0
    %v433 = vadd.f32 %v410, %v431
    %v434 = vtanh.pop %v433
    %v435 = vmul.f32 %v434, 0.5
    %v436 = vadd.f32 %v435, 0.5
    %v437 = vmul.f32 %v436, %v396
    %439 = vrot.lane.b32.xlu0 %v434, 64
    %v440 = vpop.permute.xlu0 %439
    %v442 = vmul.f32 %v436, %v440
    %444 = vrot.lane.b32.xlu0 %v442, 32
    %v445 = vpop.permute.xlu0 %444
    %v447 = vadd.f32 %v437, %v445
    %v448 = vtanh.pop %v447
    %450 = vrot.lane.b32.xlu0 %v448, 64
    %v451 = vpop.permute.xlu0 %450
    %v453 = vmul.f32 %v436, %v451
    %455 = vrot.lane.b32.xlu0 %v453, 32
    %v456 = vpop.permute.xlu0 %455
    %s458 = scalar_lea.vmem [#allocation3], 40
    %459 = vst.msk [vmem:[%s458] sm:$0xff] %vm155, %v456
    %s460 = scalar_lea.vmem [#allocation2], 48
    %v461 = vld [vmem:[%s460] sm:$0xff]
    %v462 = vsel %vm155, %v456, 0
    %464 = vmatpush.msra.mxu0 0.0
    %465 = vmatpush.msra.mxu0 0.0
    %466 = vmatpush.msra.mxu0 0.0
    %467 = vmatpush.msra.mxu0 0.0
    %468 = vmatpush.msra.mxu0 0.0
    %469 = vmatpush.msra.mxu0 0.0
    %470 = vmatpush.msra.mxu0 0.0
    %471 = vmatpush.msra.mxu0 0.0
    %472 = vmatpush.msra.mxu0 0.0
    %473 = vmatpush.msra.mxu0 0.0
    %474 = vmatpush.msra.mxu0 0.0
    %475 = vmatpush.msra.mxu0 0.0
    %476 = vmatpush.msra.mxu0 %v153
    %477 = vmatpush.msra.mxu0 %v152
    %478 = vmatpush.msra.mxu0 %v151
    %479 = vmatpush.msra.mxu0 %v150
    %480 = vmatmul.f32.gmra.mxu0 %v462
    %v481 = vpop.f32.mrf.mxu0
    %v482 = vadd.f32 0.0, %v481
    %483 = vdwg.mxu0
    %v484 = vadd.f32 %v461, %v482
    %v485 = vtanh.pop %v484
    %v486 = vmul.f32 %v485, 0.5
    %v487 = vadd.f32 %v486, 0.5
    %v488 = vmul.f32 %v487, %v447
    %490 = vrot.lane.b32.xlu0 %v485, 64
    %v491 = vpop.permute.xlu0 %490
    %v493 = vmul.f32 %v487, %v491
    %495 = vrot.lane.b32.xlu0 %v493, 32
    %v496 = vpop.permute.xlu0 %495
    %v498 = vadd.f32 %v488, %v496
    %v499 = vtanh.pop %v498
    %501 = vrot.lane.b32.xlu0 %v499, 64
    %v502 = vpop.permute.xlu0 %501
    %v504 = vmul.f32 %v487, %v502
    %506 = vrot.lane.b32.xlu0 %v504, 32
    %v507 = vpop.permute.xlu0 %506
    %s509 = scalar_lea.vmem [#allocation3], 48
    %510 = vst.msk [vmem:[%s509] sm:$0xff] %vm155, %v507
    %s511 = scalar_lea.vmem [#allocation2], 56
    %v512 = vld [vmem:[%s511] sm:$0xff]
    %v513 = vsel %vm155, %v507, 0
    %515 = vmatpush.msra.mxu0 0.0
    %516 = vmatpush.msra.mxu0 0.0
    %517 = vmatpush.msra.mxu0 0.0
    %518 = vmatpush.msra.mxu0 0.0
    %519 = vmatpush.msra.mxu0 0.0
    %520 = vmatpush.msra.mxu0 0.0
    %521 = vmatpush.msra.mxu0 0.0
    %522 = vmatpush.msra.mxu0 0.0
    %523 = vmatpush.msra.mxu0 0.0
    %524 = vmatpush.msra.mxu0 0.0
    %525 = vmatpush.msra.mxu0 0.0
    %526 = vmatpush.msra.mxu0 0.0
    %527 = vmatpush.msra.mxu0 %v153
    %528 = vmatpush.msra.mxu0 %v152
    %529 = vmatpush.msra.mxu0 %v151
    %530 = vmatpush.msra.mxu0 %v150
    %531 = vmatmul.f32.gmra.mxu0 %v513
    %v532 = vpop.f32.mrf.mxu0
    %v533 = vadd.f32 0.0, %v532
    %534 = vdwg.mxu0
    %v535 = vadd.f32 %v512, %v533
    %v536 = vtanh.pop %v535
    %v537 = vmul.f32 %v536, 0.5
    %v538 = vadd.f32 %v537, 0.5
    %v539 = vmul.f32 %v538, %v498
    %541 = vrot.lane.b32.xlu0 %v536, 64
    %v542 = vpop.permute.xlu0 %541
    %v544 = vmul.f32 %v538, %v542
    %546 = vrot.lane.b32.xlu0 %v544, 32
    %v547 = vpop.permute.xlu0 %546
    %v549 = vadd.f32 %v539, %v547
    %v550 = vtanh.pop %v549
    %552 = vrot.lane.b32.xlu0 %v550, 64
    %v553 = vpop.permute.xlu0 %552
    %v555 = vmul.f32 %v538, %v553
    %557 = vrot.lane.b32.xlu0 %v555, 32
    %v558 = vpop.permute.xlu0 %557
    %s560 = scalar_lea.vmem [#allocation3], 56
    %561 = vst.msk [vmem:[%s560] sm:$0xff] %vm155, %v558
    %v562 = vld [vmem:[#allocation3] sm:$0xff]
    %v563 = vld [vmem:[#allocation3 + $0x8] sm:$0xff]
    %v564 = vld [vmem:[#allocation3 + $0x10] sm:$0xff]
    %v565 = vld [vmem:[#allocation3 + $0x18] sm:$0xff]
    %v566 = vld [vmem:[#allocation3 + $0x20] sm:$0xff]
    %v567 = vld [vmem:[#allocation3 + $0x28] sm:$0xff]
    %v568 = vld [vmem:[#allocation3 + $0x30] sm:$0xff]
    %v569 = vld [vmem:[#allocation3 + $0x38] sm:$0xff]
    %v570 = vld [vmem:[%s4] sm:$0xff]
    %v571 = vld [vmem:[%s4 + $0x8] sm:$0xff]
    %v572 = vld [vmem:[%s4 + $0x10] sm:$0xff]
    %v573 = vld [vmem:[%s4 + $0x18] sm:$0xff]
    %v574 = vld [vmem:[%s6] sm:$0x1]
    %v576 = vperm.slane %v574, 0
    %v579 = vsel %vm155, %v562, 0
    %v582 = vsel %vm155, %v563, 0
    %v585 = vsel %vm155, %v564, 0
    %v588 = vsel %vm155, %v565, 0
    %v591 = vsel %vm155, %v566, 0
    %v594 = vsel %vm155, %v567, 0
    %v597 = vsel %vm155, %v568, 0
    %v600 = vsel %vm155, %v569, 0
    %602 = vmatpush.msra.mxu0 0.0
    %603 = vmatpush.msra.mxu0 0.0
    %604 = vmatpush.msra.mxu0 0.0
    %605 = vmatpush.msra.mxu0 0.0
    %606 = vmatpush.msra.mxu0 0.0
    %607 = vmatpush.msra.mxu0 0.0
    %608 = vmatpush.msra.mxu0 0.0
    %609 = vmatpush.msra.mxu0 0.0
    %610 = vmatpush.msra.mxu0 0.0
    %611 = vmatpush.msra.mxu0 0.0
    %612 = vmatpush.msra.mxu0 0.0
    %613 = vmatpush.msra.mxu0 0.0
    %614 = vmatpush.msra.mxu0 %v573
    %615 = vmatpush.msra.mxu0 %v572
    %616 = vmatpush.msra.mxu0 %v571
    %617 = vmatpush.msra.mxu0 %v570
    %618 = vmatmul.f32.gmra.mxu0 %v579
    %v619 = vpop.f32.mrf.mxu0
    %v620 = vadd.f32 %v576, %v619
    %621 = vmatmul.f32.gmra.mxu0 %v582
    %v622 = vpop.f32.mrf.mxu0
    %v623 = vadd.f32 %v576, %v622
    %624 = vmatmul.f32.gmra.mxu0 %v585
    %v625 = vpop.f32.mrf.mxu0
    %v626 = vadd.f32 %v576, %v625
    %627 = vmatmul.f32.gmra.mxu0 %v588
    %v628 = vpop.f32.mrf.mxu0
    %v629 = vadd.f32 %v576, %v628
    %630 = vmatmul.f32.gmra.mxu0 %v591
    %v631 = vpop.f32.mrf.mxu0
    %v632 = vadd.f32 %v576, %v631
    %633 = vmatmul.f32.gmra.mxu0 %v594
    %v634 = vpop.f32.mrf.mxu0
    %v635 = vadd.f32 %v576, %v634
    %636 = vmatmul.f32.gmra.mxu0 %v597
    %v637 = vpop.f32.mrf.mxu0
    %v638 = vadd.f32 %v576, %v637
    %639 = vmatmul.f32.gmra.mxu0 %v600
    %v640 = vpop.f32.mrf.mxu0
    %v641 = vadd.f32 %v576, %v640
    %642 = vdwg.mxu0
    %643 = vst [vmem:[#allocation2] sm:$0xff] %v620
    %644 = vst [vmem:[#allocation2 + $0x8] sm:$0xff] %v623
    %645 = vst [vmem:[#allocation2 + $0x10] sm:$0xff] %v626
    %646 = vst [vmem:[#allocation2 + $0x18] sm:$0xff] %v629
    %647 = vst [vmem:[#allocation2 + $0x20] sm:$0xff] %v632
    %648 = vst [vmem:[#allocation2 + $0x28] sm:$0xff] %v635
    %649 = vst [vmem:[#allocation2 + $0x30] sm:$0xff] %v638
    %650 = vst [vmem:[#allocation2 + $0x38] sm:$0xff] %v641
    %v651 = vld [vmem:[%s5] sm:$0xff]
    %v652 = vld [vmem:[%s5 + $0x8] sm:$0xff]
    %v653 = vld [vmem:[%s5 + $0x10] sm:$0xff]
    %v654 = vld [vmem:[%s5 + $0x18] sm:$0xff]
    %v655 = vld [vmem:[#allocation2] sm:$0xff]
    %656 = vmatpush.msra.mxu0 0.0
    %657 = vmatpush.msra.mxu0 0.0
    %658 = vmatpush.msra.mxu0 0.0
    %659 = vmatpush.msra.mxu0 0.0
    %660 = vmatpush.msra.mxu0 0.0
    %661 = vmatpush.msra.mxu0 0.0
    %662 = vmatpush.msra.mxu0 0.0
    %663 = vmatpush.msra.mxu0 0.0
    %664 = vmatpush.msra.mxu0 0.0
    %665 = vmatpush.msra.mxu0 0.0
    %666 = vmatpush.msra.mxu0 0.0
    %667 = vmatpush.msra.mxu0 0.0
    %668 = vmatpush.msra.mxu0 %v654
    %669 = vmatpush.msra.mxu0 %v653
    %670 = vmatpush.msra.mxu0 %v652
    %671 = vmatpush.msra.mxu0 %v651
    %672 = vmatmul.f32.gmra.mxu0 %v157
    %v673 = vpop.f32.mrf.mxu0
    %v674 = vadd.f32 0.0, %v673
    %675 = vdwg.mxu0
    %v676 = vadd.f32 %v655, %v674
    %v677 = vtanh.pop %v676
    %v678 = vmul.f32 %v677, 0.5
    %v679 = vadd.f32 %v678, 0.5
    %v680 = vmul.f32 %v679, 0.0
    %682 = vrot.lane.b32.xlu0 %v677, 64
    %v683 = vpop.permute.xlu0 %682
    %v685 = vmul.f32 %v679, %v683
    %687 = vrot.lane.b32.xlu0 %v685, 32
    %v688 = vpop.permute.xlu0 %687
    %v690 = vadd.f32 %v680, %v688
    %v691 = vtanh.pop %v690
    %693 = vrot.lane.b32.xlu0 %v691, 64
    %v694 = vpop.permute.xlu0 %693
    %v696 = vmul.f32 %v679, %v694
    %v697 = vld [vmem:[%s205] sm:$0xff]
    %699 = vrot.lane.b32.xlu0 %v696, 32
    %v700 = vpop.permute.xlu0 %699
    %v701 = vsel %vm155, %v700, 0
    %703 = vmatpush.msra.mxu0 0.0
    %704 = vmatpush.msra.mxu0 0.0
    %705 = vmatpush.msra.mxu0 0.0
    %706 = vmatpush.msra.mxu0 0.0
    %707 = vmatpush.msra.mxu0 0.0
    %708 = vmatpush.msra.mxu0 0.0
    %709 = vmatpush.msra.mxu0 0.0
    %710 = vmatpush.msra.mxu0 0.0
    %711 = vmatpush.msra.mxu0 0.0
    %712 = vmatpush.msra.mxu0 0.0
    %713 = vmatpush.msra.mxu0 0.0
    %714 = vmatpush.msra.mxu0 0.0
    %715 = vmatpush.msra.mxu0 %v654
    %716 = vmatpush.msra.mxu0 %v653
    %717 = vmatpush.msra.mxu0 %v652
    %718 = vmatpush.msra.mxu0 %v651
    %719 = vmatmul.f32.gmra.mxu0 %v701
    %v720 = vpop.f32.mrf.mxu0
    %v721 = vadd.f32 0.0, %v720
    %722 = vdwg.mxu0
    %v723 = vadd.f32 %v697, %v721
    %v724 = vtanh.pop %v723
    %v725 = vmul.f32 %v724, 0.5
    %v726 = vadd.f32 %v725, 0.5
    %v727 = vmul.f32 %v726, %v690
    %729 = vrot.lane.b32.xlu0 %v724, 64
    %v730 = vpop.permute.xlu0 %729
    %v732 = vmul.f32 %v726, %v730
    %734 = vrot.lane.b32.xlu0 %v732, 32
    %v735 = vpop.permute.xlu0 %734
    %v737 = vadd.f32 %v727, %v735
    %v738 = vtanh.pop %v737
    %740 = vrot.lane.b32.xlu0 %v738, 64
    %v741 = vpop.permute.xlu0 %740
    %v743 = vmul.f32 %v726, %v741
    %v744 = vld [vmem:[%s256] sm:$0xff]
    %746 = vrot.lane.b32.xlu0 %v743, 32
    %v747 = vpop.permute.xlu0 %746
    %v748 = vsel %vm155, %v747, 0
    %750 = vmatpush.msra.mxu0 0.0
    %751 = vmatpush.msra.mxu0 0.0
    %752 = vmatpush.msra.mxu0 0.0
    %753 = vmatpush.msra.mxu0 0.0
    %754 = vmatpush.msra.mxu0 0.0
    %755 = vmatpush.msra.mxu0 0.0
    %756 = vmatpush.msra.mxu0 0.0
    %757 = vmatpush.msra.mxu0 0.0
    %758 = vmatpush.msra.mxu0 0.0
    %759 = vmatpush.msra.mxu0 0.0
    %760 = vmatpush.msra.mxu0 0.0
    %761 = vmatpush.msra.mxu0 0.0
    %762 = vmatpush.msra.mxu0 %v654
    %763 = vmatpush.msra.mxu0 %v653
    %764 = vmatpush.msra.mxu0 %v652
    %765 = vmatpush.msra.mxu0 %v651
    %766 = vmatmul.f32.gmra.mxu0 %v748
    %v767 = vpop.f32.mrf.mxu0
    %v768 = vadd.f32 0.0, %v767
    %769 = vdwg.mxu0
    %v770 = vadd.f32 %v744, %v768
    %v771 = vtanh.pop %v770
    %v772 = vmul.f32 %v771, 0.5
    %v773 = vadd.f32 %v772, 0.5
    %v774 = vmul.f32 %v773, %v737
    %776 = vrot.lane.b32.xlu0 %v771, 64
    %v777 = vpop.permute.xlu0 %776
    %v779 = vmul.f32 %v773, %v777
    %781 = vrot.lane.b32.xlu0 %v779, 32
    %v782 = vpop.permute.xlu0 %781
    %v784 = vadd.f32 %v774, %v782
    %v785 = vtanh.pop %v784
    %787 = vrot.lane.b32.xlu0 %v785, 64
    %v788 = vpop.permute.xlu0 %787
    %v790 = vmul.f32 %v773, %v788
    %v791 = vld [vmem:[%s307] sm:$0xff]
    %793 = vrot.lane.b32.xlu0 %v790, 32
    %v794 = vpop.permute.xlu0 %793
    %v795 = vsel %vm155, %v794, 0
    %797 = vmatpush.msra.mxu0 0.0
    %798 = vmatpush.msra.mxu0 0.0
    %799 = vmatpush.msra.mxu0 0.0
    %800 = vmatpush.msra.mxu0 0.0
    %801 = vmatpush.msra.mxu0 0.0
    %802 = vmatpush.msra.mxu0 0.0
    %803 = vmatpush.msra.mxu0 0.0
    %804 = vmatpush.msra.mxu0 0.0
    %805 = vmatpush.msra.mxu0 0.0
    %806 = vmatpush.msra.mxu0 0.0
    %807 = vmatpush.msra.mxu0 0.0
    %808 = vmatpush.msra.mxu0 0.0
    %809 = vmatpush.msra.mxu0 %v654
    %810 = vmatpush.msra.mxu0 %v653
    %811 = vmatpush.msra.mxu0 %v652
    %812 = vmatpush.msra.mxu0 %v651
    %813 = vmatmul.f32.gmra.mxu0 %v795
    %v814 = vpop.f32.mrf.mxu0
    %v815 = vadd.f32 0.0, %v814
    %816 = vdwg.mxu0
    %v817 = vadd.f32 %v791, %v815
    %v818 = vtanh.pop %v817
    %v819 = vmul.f32 %v818, 0.5
    %v820 = vadd.f32 %v819, 0.5
    %v821 = vmul.f32 %v820, %v784
    %823 = vrot.lane.b32.xlu0 %v818, 64
    %v824 = vpop.permute.xlu0 %823
    %v826 = vmul.f32 %v820, %v824
    %828 = vrot.lane.b32.xlu0 %v826, 32
    %v829 = vpop.permute.xlu0 %828
    %v831 = vadd.f32 %v821, %v829
    %v832 = vtanh.pop %v831
    %834 = vrot.lane.b32.xlu0 %v832, 64
    %v835 = vpop.permute.xlu0 %834
    %v837 = vmul.f32 %v820, %v835
    %v838 = vld [vmem:[%s358] sm:$0xff]
    %840 = vrot.lane.b32.xlu0 %v837, 32
    %v841 = vpop.permute.xlu0 %840
    %v842 = vsel %vm155, %v841, 0
    %844 = vmatpush.msra.mxu0 0.0
    %845 = vmatpush.msra.mxu0 0.0
    %846 = vmatpush.msra.mxu0 0.0
    %847 = vmatpush.msra.mxu0 0.0
    %848 = vmatpush.msra.mxu0 0.0
    %849 = vmatpush.msra.mxu0 0.0
    %850 = vmatpush.msra.mxu0 0.0
    %851 = vmatpush.msra.mxu0 0.0
    %852 = vmatpush.msra.mxu0 0.0
    %853 = vmatpush.msra.mxu0 0.0
    %854 = vmatpush.msra.mxu0 0.0
    %855 = vmatpush.msra.mxu0 0.0
    %856 = vmatpush.msra.mxu0 %v654
    %857 = vmatpush.msra.mxu0 %v653
    %858 = vmatpush.msra.mxu0 %v652
    %859 = vmatpush.msra.mxu0 %v651
    %860 = vmatmul.f32.gmra.mxu0 %v842
    %v861 = vpop.f32.mrf.mxu0
    %v862 = vadd.f32 0.0, %v861
    %863 = vdwg.mxu0
    %v864 = vadd.f32 %v838, %v862
    %v865 = vtanh.pop %v864
    %v866 = vmul.f32 %v865, 0.5
    %v867 = vadd.f32 %v866, 0.5
    %v868 = vmul.f32 %v867, %v831
    %870 = vrot.lane.b32.xlu0 %v865, 64
    %v871 = vpop.permute.xlu0 %870
    %v873 = vmul.f32 %v867, %v871
    %875 = vrot.lane.b32.xlu0 %v873, 32
    %v876 = vpop.permute.xlu0 %875
    %v878 = vadd.f32 %v868, %v876
    %v879 = vtanh.pop %v878
    %881 = vrot.lane.b32.xlu0 %v879, 64
    %v882 = vpop.permute.xlu0 %881
    %v884 = vmul.f32 %v867, %v882
    %v885 = vld [vmem:[%s409] sm:$0xff]
    %887 = vrot.lane.b32.xlu0 %v884, 32
    %v888 = vpop.permute.xlu0 %887
    %v889 = vsel %vm155, %v888, 0
    %891 = vmatpush.msra.mxu0 0.0
    %892 = vmatpush.msra.mxu0 0.0
    %893 = vmatpush.msra.mxu0 0.0
    %894 = vmatpush.msra.mxu0 0.0
    %895 = vmatpush.msra.mxu0 0.0
    %896 = vmatpush.msra.mxu0 0.0
    %897 = vmatpush.msra.mxu0 0.0
    %898 = vmatpush.msra.mxu0 0.0
    %899 = vmatpush.msra.mxu0 0.0
    %900 = vmatpush.msra.mxu0 0.0
    %901 = vmatpush.msra.mxu0 0.0
    %902 = vmatpush.msra.mxu0 0.0
    %903 = vmatpush.msra.mxu0 %v654
    %904 = vmatpush.msra.mxu0 %v653
    %905 = vmatpush.msra.mxu0 %v652
    %906 = vmatpush.msra.mxu0 %v651
    %907 = vmatmul.f32.gmra.mxu0 %v889
    %v908 = vpop.f32.mrf.mxu0
    %v909 = vadd.f32 0.0, %v908
    %910 = vdwg.mxu0
    %v911 = vadd.f32 %v885, %v909
    %v912 = vtanh.pop %v911
    %v913 = vmul.f32 %v912, 0.5
    %v914 = vadd.f32 %v913, 0.5
    %v915 = vmul.f32 %v914, %v878
    %917 = vrot.lane.b32.xlu0 %v912, 64
    %v918 = vpop.permute.xlu0 %917
    %v920 = vmul.f32 %v914, %v918
    %922 = vrot.lane.b32.xlu0 %v920, 32
    %v923 = vpop.permute.xlu0 %922
    %v925 = vadd.f32 %v915, %v923
    %v926 = vtanh.pop %v925
    %928 = vrot.lane.b32.xlu0 %v926, 64
    %v929 = vpop.permute.xlu0 %928
    %v931 = vmul.f32 %v914, %v929
    %v932 = vld [vmem:[%s460] sm:$0xff]
    %934 = vrot.lane.b32.xlu0 %v931, 32
    %v935 = vpop.permute.xlu0 %934
    %v936 = vsel %vm155, %v935, 0
    %938 = vmatpush.msra.mxu0 0.0
    %939 = vmatpush.msra.mxu0 0.0
    %940 = vmatpush.msra.mxu0 0.0
    %941 = vmatpush.msra.mxu0 0.0
    %942 = vmatpush.msra.mxu0 0.0
    %943 = vmatpush.msra.mxu0 0.0
    %944 = vmatpush.msra.mxu0 0.0
    %945 = vmatpush.msra.mxu0 0.0
    %946 = vmatpush.msra.mxu0 0.0
    %947 = vmatpush.msra.mxu0 0.0
    %948 = vmatpush.msra.mxu0 0.0
    %949 = vmatpush.msra.mxu0 0.0
    %950 = vmatpush.msra.mxu0 %v654
    %951 = vmatpush.msra.mxu0 %v653
    %952 = vmatpush.msra.mxu0 %v652
    %953 = vmatpush.msra.mxu0 %v651
    %954 = vmatmul.f32.gmra.mxu0 %v936
    %v955 = vpop.f32.mrf.mxu0
    %v956 = vadd.f32 0.0, %v955
    %957 = vdwg.mxu0
    %v958 = vadd.f32 %v932, %v956
    %v959 = vtanh.pop %v958
    %v960 = vmul.f32 %v959, 0.5
    %v961 = vadd.f32 %v960, 0.5
    %v962 = vmul.f32 %v961, %v925
    %964 = vrot.lane.b32.xlu0 %v959, 64
    %v965 = vpop.permute.xlu0 %964
    %v967 = vmul.f32 %v961, %v965
    %969 = vrot.lane.b32.xlu0 %v967, 32
    %v970 = vpop.permute.xlu0 %969
    %v972 = vadd.f32 %v962, %v970
    %v973 = vtanh.pop %v972
    %975 = vrot.lane.b32.xlu0 %v973, 64
    %v976 = vpop.permute.xlu0 %975
    %v978 = vmul.f32 %v961, %v976
    %v979 = vld [vmem:[%s511] sm:$0xff]
    %981 = vrot.lane.b32.xlu0 %v978, 32
    %v982 = vpop.permute.xlu0 %981
    %v983 = vsel %vm155, %v982, 0
    %985 = vmatpush.msra.mxu0 0.0
    %986 = vmatpush.msra.mxu0 0.0
    %987 = vmatpush.msra.mxu0 0.0
    %988 = vmatpush.msra.mxu0 0.0
    %989 = vmatpush.msra.mxu0 0.0
    %990 = vmatpush.msra.mxu0 0.0
    %991 = vmatpush.msra.mxu0 0.0
    %992 = vmatpush.msra.mxu0 0.0
    %993 = vmatpush.msra.mxu0 0.0
    %994 = vmatpush.msra.mxu0 0.0
    %995 = vmatpush.msra.mxu0 0.0
    %996 = vmatpush.msra.mxu0 0.0
    %997 = vmatpush.msra.mxu0 %v654
    %998 = vmatpush.msra.mxu0 %v653
    %999 = vmatpush.msra.mxu0 %v652
    %1000 = vmatpush.msra.mxu0 %v651
    %1001 = vmatmul.f32.gmra.mxu0 %v983
    %v1002 = vpop.f32.mrf.mxu0
    %v1003 = vadd.f32 0.0, %v1002
    %1004 = vdwg.mxu0
    %v1005 = vadd.f32 %v979, %v1003
    %v1006 = vtanh.pop %v1005
    %v1007 = vmul.f32 %v1006, 0.5
    %v1008 = vadd.f32 %v1007, 0.5
    %v1009 = vmul.f32 %v1008, %v972
    %1011 = vrot.lane.b32.xlu0 %v1006, 64
    %v1012 = vpop.permute.xlu0 %1011
    %v1014 = vmul.f32 %v1008, %v1012
    %1016 = vrot.lane.b32.xlu0 %v1014, 32
    %v1017 = vpop.permute.xlu0 %1016
    %v1019 = vadd.f32 %v1009, %v1017
    %v1020 = vtanh.pop %v1019
    %1022 = vrot.lane.b32.xlu0 %v1020, 64
    %v1023 = vpop.permute.xlu0 %1022
    %v1025 = vmul.f32 %v1008, %v1023
    %v1026 = vld [vmem:[#allocation4] sm:$0xff]
    %v1027 = vld [vmem:[#allocation4 + $0x8] sm:$0xff]
    %v1028 = vld [vmem:[#allocation4 + $0x10] sm:$0xff]
    %v1029 = vld [vmem:[#allocation4 + $0x18] sm:$0xff]
    %v1030 = vld [vmem:[#allocation6] sm:$0x1]
    %v1032 = vperm.slane %v1030, 0
    %1035 = vrot.lane.b32.xlu0 %v1025, 32
    %v1036 = vpop.permute.xlu0 %1035
    %v1037 = vsel %vm155, %v1036, 0
    %1039 = vmatpush.msra.mxu0 0.0
    %1040 = vmatpush.msra.mxu0 0.0
    %1041 = vmatpush.msra.mxu0 0.0
    %1042 = vmatpush.msra.mxu0 0.0
    %1043 = vmatpush.msra.mxu0 0.0
    %1044 = vmatpush.msra.mxu0 0.0
    %1045 = vmatpush.msra.mxu0 0.0
    %1046 = vmatpush.msra.mxu0 0.0
    %1047 = vmatpush.msra.mxu0 0.0
    %1048 = vmatpush.msra.mxu0 0.0
    %1049 = vmatpush.msra.mxu0 0.0
    %1050 = vmatpush.msra.mxu0 0.0
    %1051 = vmatpush.msra.mxu0 %v1029
    %1052 = vmatpush.msra.mxu0 %v1028
    %1053 = vmatpush.msra.mxu0 %v1027
    %1054 = vmatpush.msra.mxu0 %v1026
    %1055 = vmatmul.f32.gmra.mxu0 %v1037
    %v1056 = vpop.f32.mrf.mxu0
    %v1057 = vadd.f32 %v1032, %v1056
    %1058 = vdwg.mxu0
    %vm1059 = vcmask 31744
    %1060 = vst.msk [vmem:[%s9] sm:$0xff] %vm1059, %v1057
    // Predicated region
    $region46: #{lstm_model_forward.1} parent=1 // pred_check
      _
    $region47: #{lstm_model_forward.1} parent=1 // pred_check_branch
      %1062 = sbr.rel (0) target = $region49
    $region48: #{lstm_model_forward.1} parent=1 // pred_region
      _
    $region49: #{lstm_model_forward.1} parent=1 // pred_fallthru
      _
    // Predicated region
    $region50: #{lstm_model_forward.1} parent=1 // pred_check
      _
    $region51: #{lstm_model_forward.1} parent=1 // pred_check_branch
      %1064 = sbr.rel (0) target = $region53
    $region52: #{lstm_model_forward.1} parent=1 // pred_region
      _
    $region53: #{lstm_model_forward.1} parent=1 // pred_fallthru
      _
    %1065 = vsyncpa [#allocation5], 1
    %1066 = vsyncpa [#allocation7], 1

</llo_original>
